<compile_context>
chip_gen: v7x
topology: tpu7x:2x2x1
jax: 0.10.0
libtpu: 0.0.40
codegen_flags: <defaults>
</compile_context>

<pallas_src>
import numpy as np
import jax
import jax.numpy as jnp
from jax import lax
from jax.experimental import pallas as pl
from jax.experimental.pallas import tpu as pltpu

# tap tables: for output parity r, the two contributing kernel taps and the matching offsets
# into the zero-padded input (pad=1 each side).
#   r=0: k in {1,3} -> padded offsets {1,0};  r=1: k in {0,2} -> padded offsets {2,1}
_KH_TAB = ((1, 3), (0, 2))
_OH_TAB = ((1, 0), (2, 1))
_TAP_AB = ((0, 0), (0, 1), (1, 0), (1, 1))


def _make_kernel(*, TB, H, W, Cin, Cout, TH, fuse_k, cdtype):
    Hp, Wp = H + 2, W + 2
    n_h = H // TH
    Mt = TB * TH * W

    def kernel(x_ref, w_ref, b_ref, o_ref, xpad_ref):
        # x_ref   : (TB, H, W, Cin)        bf16  unpadded input block
        # w_ref   : (2,2,4*Cin,Cout) or (2,2,4,Cin,Cout)  bf16, resident
        # b_ref   : (1, Cout)              f32
        # o_ref   : (TB, H, 2, W, 2*Cout)  out dtype
        # xpad_ref: (TB, Hp, Wp, Cin)      bf16 VMEM scratch (padded slab)

        # ---- build the zero-padded slab in VMEM (pad folded into the kernel) ----
        zrow = jnp.zeros((TB, 1, Wp, Cin), cdtype)
        xpad_ref[:, 0:1, :, :] = zrow
        xpad_ref[:, Hp - 1:Hp, :, :] = zrow
        zcol = jnp.zeros((TB, Hp, 1, Cin), cdtype)
        xpad_ref[:, :, 0:1, :] = zcol
        xpad_ref[:, :, Wp - 1:Wp, :] = zcol
        xpad_ref[:, 1:H + 1, 1:W + 1, :] = x_ref[...]

        bias = b_ref[...].astype(jnp.float32)   # (1, Cout), hoisted out of parity loops

        def chunk(h0):
            # 9 distinct shifted patches for this row chunk, reshaped once to (Mt, Cin)
            pat = [[xpad_ref[:, pl.ds(h0 + oh, TH), ow:ow + W, :].reshape(Mt, Cin)
                    for ow in range(3)] for oh in range(3)]
            rows = []
            for rh in range(2):
                cols = []
                for rw in range(2):
                    if fuse_k:
                        # small Cin: single MXU contraction with K = 4*Cin
                        xi = jnp.concatenate(
                            [pat[_OH_TAB[rh][a]][_OH_TAB[rw][b]] for a, b in _TAP_AB],
                            axis=-1)                                  # (Mt, 4*Cin)
                        acc = jnp.dot(xi, w_ref[rh, rw],
                                      preferred_element_type=jnp.float32)
                    else:
                        # large Cin: 4 accumulating K=Cin dots, no (Mt, 4*Cin) concat copies
                        acc = None
                        for t, (a, b) in enumerate(_TAP_AB):
                            part = jnp.dot(pat[_OH_TAB[rh][a]][_OH_TAB[rw][b]],
                                           w_ref[rh, rw, t],
                                           preferred_element_type=jnp.float32)
                            acc = part if acc is None else acc + part
                    acc = acc + bias
                    # Swish in f32; divide handled by the EUP approximate reciprocal
                    y = acc * pl.reciprocal(1.0 + jnp.exp(-acc), approx=True)
                    cols.append(y.astype(o_ref.dtype))
                rows.append(jnp.concatenate(cols, axis=-1)            # (Mt, 2*Cout)
                            .reshape(TB, TH, 1, W, 2 * Cout))
            # one dense store per chunk: both row parities, lane-packed column parity
            o_ref[:, pl.ds(h0, TH), :, :, :] = jnp.concatenate(rows, axis=2)

        if n_h == 1:
            chunk(0)
        else:
            def body(t, carry):
                chunk(t * TH)
                return carry
            lax.fori_loop(0, n_h, body, 0)

    return kernel


def _divisors(n):
    return [d for d in range(1, n + 1) if n % d == 0]


def _vmem_plan():
    """Generation-aware VMEM numbers: (compiler limit, planning budget) in bytes."""
    try:
        cap = int(pltpu.get_tpu_info().vmem_capacity_bytes)
    except Exception:
        cap = 64 * 1024 * 1024                    # conservative fallback (v7x per-core size)
    limit = min((cap * 3) // 4, 100 * 1024 * 1024)   # never the full physical VMEM
    budget = min(cap // 2, (limit * 3) // 4)
    return limit, budget


def _plan_tiles(B, H, W, Cin, Cout, cbytes, obytes, fuse_k, budget, max_rows):
    """Pick (TB slices per grid step, TH rows per in-kernel chunk) under the VMEM budget."""
    Hp, Wp = H + 2, W + 2
    # fixed: resident weights (double-buffered) + bias + slack
    fixed = 2 * (2 * 2 * 4 * Cin * Cout) * cbytes + 2 * Cout * 4 + (1 << 20)
    # per (n,d)-slice: input block (x2 buffers) + padded scratch + output block (x2 buffers)
    per_slice = (2 * (H * W * Cin * cbytes)
                 + (Hp * Wp * Cin * cbytes)
                 + 2 * (4 * H * W * Cout * obytes))
    # per row of a chunk: 9 patches, lane-concats (fused path), f32 acc/act, packed outputs
    per_row = W * (9 * Cin * cbytes
                   + (16 * Cin * cbytes if fuse_k else 0)
                   + 8 * Cout * 4
                   + 8 * Cout * obytes)

    def fits(tb, th):
        return fixed + tb * per_slice + tb * th * per_row <= budget

    h_divs = _divisors(H)
    if max_rows is not None:
        h_divs = [d for d in h_divs if d <= max_rows] or [1]

    tb_cands = [d for d in _divisors(B) if fits(d, h_divs[0])] or [1]
    steps = lambda d: B // d
    # prefer >= 4 (even) grid steps so both v7x TensorCores get >= 2 pipelined iterations
    pref = ([d for d in tb_cands if steps(d) >= 4 and steps(d) % 2 == 0]
            or [d for d in tb_cands if steps(d) >= 4]
            or [d for d in tb_cands if steps(d) >= 2]
            or tb_cands)
    TB = max(pref)
    th_fit = [t for t in h_divs if fits(TB, t)] or [h_divs[0]]
    TH = max(th_fit)
    return TB, TH


def upsample_block(x_ncdhw, weight, bias, *,
                   compute_dtype=jnp.bfloat16,
                   max_rows_per_chunk=None):
    """ConvTranspose3d(k=(1,4,4), s=(1,2,2), p=(0,1,1)) + Swish (x * sigmoid(x)).

    x_ncdhw: (N, Cin, D, H, W);  weight: (Cin, Cout, 1, 4, 4);  bias: (Cout,)
    returns: (N, Cout, D, 2H, 2W) in x's dtype.
    """
    N, Cin, D, H, W = x_ncdhw.shape
    Cout = weight.shape[1]
    B = N * D
    out_dtype = x_ncdhw.dtype
    cbytes = jnp.dtype(compute_dtype).itemsize
    obytes = jnp.dtype(out_dtype).itemsize
    fuse_k = (4 * Cin) < 512          # small Cin: fuse taps into one K=4*Cin contraction

    vmem_limit, vmem_budget = _vmem_plan()
    TB, TH = _plan_tiles(B, H, W, Cin, Cout, cbytes, obytes, fuse_k,
                         vmem_budget, max_rows_per_chunk)

    # glue (PyTorch I/O contract): channels-last + fold depth into batch; the bf16 cast fuses
    # into this pass, and the zero-pad is now done inside the kernel (no extra HBM array).
    x_bhwc = jnp.transpose(x_ncdhw, (0, 2, 3, 4, 1)).reshape(B, H, W, Cin)
    x_bhwc = x_bhwc.astype(compute_dtype)

    # per-parity weights; same tap order as the kernel's patch enumeration.
    w2 = weight[:, :, 0]                                  # (Cin, Cout, 4, 4)
    taps = [[[w2[:, :, _KH_TAB[rh][a], _KH_TAB[rw][b]] for a, b in _TAP_AB]
             for rw in range(2)] for rh in range(2)]
    if fuse_k:
        wk = jnp.stack([jnp.stack([jnp.concatenate(taps[rh][rw], axis=0)
                                   for rw in range(2)], axis=0)
                        for rh in range(2)], axis=0)      # (2, 2, 4*Cin, Cout)
        w_spec = pl.BlockSpec((2, 2, 4 * Cin, Cout), lambda i: (0, 0, 0, 0))
    else:
        wk = jnp.stack([jnp.stack([jnp.stack(taps[rh][rw], axis=0)
                                   for rw in range(2)], axis=0)
                        for rh in range(2)], axis=0)      # (2, 2, 4, Cin, Cout)
        w_spec = pl.BlockSpec((2, 2, 4, Cin, Cout), lambda i: (0, 0, 0, 0, 0))
    wk = wk.astype(compute_dtype)
    b2d = bias.reshape(1, Cout).astype(jnp.float32)

    kernel = _make_kernel(TB=TB, H=H, W=W, Cin=Cin, Cout=Cout, TH=TH,
                          fuse_k=fuse_k, cdtype=compute_dtype)

    out_raw = pl.pallas_call(
        kernel,
        out_shape=jax.ShapeDtypeStruct((B, H, 2, W, 2 * Cout), out_dtype),
        grid_spec=pltpu.PrefetchScalarGridSpec(
            num_scalar_prefetch=0,
            grid=(B // TB,),
            in_specs=[
                pl.BlockSpec((TB, H, W, Cin), lambda i: (i, 0, 0, 0)),
                w_spec,
                pl.BlockSpec((1, Cout), lambda i: (0, 0)),
            ],
            out_specs=pl.BlockSpec((TB, H, 2, W, 2 * Cout),
                                   lambda i: (i, 0, 0, 0, 0)),
            scratch_shapes=[pltpu.VMEM((TB, H + 2, W + 2, Cin), compute_dtype)],
        ),
        compiler_params=pltpu.CompilerParams(
            dimension_semantics=("parallel",),
            vmem_limit_bytes=vmem_limit),
    )(x_bhwc, wk, b2d)

    # parity interleave is a pure (free) reshape; only the NCDHW transpose of the I/O contract
    # remains (documented HBM round trip — drop it if the surrounding model is channels-last).
    out = out_raw.reshape(N, D, 2 * H, 2 * W, Cout)
    return jnp.transpose(out, (0, 4, 1, 2, 3))


def _reference(x_ncdhw, weight, bias):
    """Pure-JAX f32 reference: fractionally-strided conv formulation."""
    N, Cin, D, H, W = x_ncdhw.shape
    Cout = weight.shape[1]
    x2d = jnp.transpose(x_ncdhw, (0, 2, 1, 3, 4)).reshape(N * D, Cin, H, W)
    w_conv = jnp.transpose(weight[:, :, 0, ::-1, ::-1], (1, 0, 2, 3))   # (Cout, Cin, 4, 4)
    y = lax.conv_general_dilated(
        x2d, w_conv, window_strides=(1, 1),
        padding=((2, 2), (2, 2)), lhs_dilation=(2, 2),
        dimension_numbers=('NCHW', 'OIHW', 'NCHW'))
    y = y + bias[None, :, None, None]
    y = y * jax.nn.sigmoid(y)
    y = y.reshape(N, D, Cout, 2 * H, 2 * W)
    return jnp.transpose(y, (0, 2, 1, 3, 4))


if __name__ == "__main__":
    key = jax.random.PRNGKey(0)
    k1, k2, k3, k4, k5, k6 = jax.random.split(key, 6)

    # Test 1: small channels -> fused K=4*Cin path, single H chunk.
    N, Cin, Cout, D, H, W = 2, 8, 16, 3, 8, 8
    x = jax.random.normal(k1, (N, Cin, D, H, W), jnp.float32)
    wt = jax.random.normal(k2, (Cin, Cout, 1, 4, 4), jnp.float32) * 0.1
    bs = jax.random.normal(k3, (Cout,), jnp.float32) * 0.1
    out = jax.block_until_ready(upsample_block(x, wt, bs))
    ref = jax.block_until_ready(_reference(x, wt, bs))
    assert out.shape == (N, Cout, D, 2 * H, 2 * W), out.shape
    np.testing.assert_allclose(np.asarray(out), np.asarray(ref), rtol=3e-2, atol=5e-2)

    # Test 2: Cin >= 128 -> split-K accumulating-dot path + multi-chunk row loop (TH=4).
    N2, Cin2, Cout2, D2, H2, W2 = 1, 128, 128, 2, 8, 8
    x2 = jax.random.normal(k4, (N2, Cin2, D2, H2, W2), jnp.float32)
    wt2 = jax.random.normal(k5, (Cin2, Cout2, 1, 4, 4), jnp.float32) * 0.1
    bs2 = jax.random.normal(k6, (Cout2,), jnp.float32) * 0.1
    out2 = jax.block_until_ready(upsample_block(x2, wt2, bs2, max_rows_per_chunk=4))
    ref2 = jax.block_until_ready(_reference(x2, wt2, bs2))
    assert out2.shape == (N2, Cout2, D2, 2 * H2, 2 * W2), out2.shape
    np.testing.assert_allclose(np.asarray(out2), np.asarray(ref2), rtol=3e-2, atol=5e-2)

    print("KERNEL_OK")
</pallas_src>

<mosaic_0001>
module attributes {stable_mosaic.version = 11 : i64} {
  func.func @kernel(%arg0: i32, %arg1: memref<1x8x8x8xbf16, #tpu.memory_space<vmem>>, %arg2: memref<2x2x32x16xbf16, #tpu.memory_space<vmem>>, %arg3: memref<1x16xf32, #tpu.memory_space<vmem>>, %arg4: memref<1x8x2x8x32xf32, #tpu.memory_space<vmem>>, %arg5: memref<1x10x10x8xbf16, #tpu.memory_space<vmem>>) attributes {dimension_semantics = [#tpu.dimension_semantics<parallel>], iteration_bounds = array<i64: 6>, scalar_prefetch = 0 : i64, scratch_operands = 1 : i64, tpu.core_type = #tpu.core_type<tc>, window_params = [{transform_indices = @transform_0, window_bounds = array<i64: 1, 8, 8, 8>}, {pipeline_mode = #tpu.pipeline_mode<synchronous>, transform_indices = @transform_1, window_bounds = array<i64: 2, 2, 32, 16>}, {pipeline_mode = #tpu.pipeline_mode<synchronous>, transform_indices = @transform_2, window_bounds = array<i64: 1, 16>}, {transform_indices = @transform_3, window_bounds = array<i64: 1, 8, 2, 8, 32>}]} {
    %cst = arith.constant 0.000000e+00 : bf16
    %0 = vector.broadcast %cst : bf16 to vector<1x1x10x8xbf16>
    %c0 = arith.constant 0 : index
    %c0_0 = arith.constant 0 : index
    %c0_1 = arith.constant 0 : index
    %c0_2 = arith.constant 0 : index
    %1 = vector.load %arg5[%c0, %c0_0, %c0_1, %c0_2] : memref<1x10x10x8xbf16, #tpu.memory_space<vmem>>, vector<1x1x10x8xbf16>
    tpu.vector_store %arg5[%c0, %c0_0, %c0_1, %c0_2], %0 {strides = array<i32>} : memref<1x10x10x8xbf16, #tpu.memory_space<vmem>>, vector<1x1x10x8xbf16>,
    %c0_3 = arith.constant 0 : index
    %c9 = arith.constant 9 : index
    %c0_4 = arith.constant 0 : index
    %c0_5 = arith.constant 0 : index
    %2 = vector.load %arg5[%c0_3, %c9, %c0_4, %c0_5] : memref<1x10x10x8xbf16, #tpu.memory_space<vmem>>, vector<1x1x10x8xbf16>
    tpu.vector_store %arg5[%c0_3, %c9, %c0_4, %c0_5], %0 {strides = array<i32>} : memref<1x10x10x8xbf16, #tpu.memory_space<vmem>>, vector<1x1x10x8xbf16>,
    %cst_6 = arith.constant 0.000000e+00 : bf16
    %3 = vector.broadcast %cst_6 : bf16 to vector<1x10x1x8xbf16>
    %c0_7 = arith.constant 0 : index
    %c0_8 = arith.constant 0 : index
    %c0_9 = arith.constant 0 : index
    %c0_10 = arith.constant 0 : index
    %4 = vector.load %arg5[%c0_7, %c0_8, %c0_9, %c0_10] : memref<1x10x10x8xbf16, #tpu.memory_space<vmem>>, vector<1x10x1x8xbf16>
    tpu.vector_store %arg5[%c0_7, %c0_8, %c0_9, %c0_10], %3 {strides = array<i32>} : memref<1x10x10x8xbf16, #tpu.memory_space<vmem>>, vector<1x10x1x8xbf16>,
    %c0_11 = arith.constant 0 : index
    %c0_12 = arith.constant 0 : index
    %c9_13 = arith.constant 9 : index
    %c0_14 = arith.constant 0 : index
    %5 = vector.load %arg5[%c0_11, %c0_12, %c9_13, %c0_14] : memref<1x10x10x8xbf16, #tpu.memory_space<vmem>>, vector<1x10x1x8xbf16>
    tpu.vector_store %arg5[%c0_11, %c0_12, %c9_13, %c0_14], %3 {strides = array<i32>} : memref<1x10x10x8xbf16, #tpu.memory_space<vmem>>, vector<1x10x1x8xbf16>,
    %c0_15 = arith.constant 0 : index
    %c0_16 = arith.constant 0 : index
    %c0_17 = arith.constant 0 : index
    %c0_18 = arith.constant 0 : index
    %6 = vector.load %arg1[%c0_15, %c0_16, %c0_17, %c0_18] : memref<1x8x8x8xbf16, #tpu.memory_space<vmem>>, vector<1x8x8x8xbf16>
    %c0_19 = arith.constant 0 : index
    %c1 = arith.constant 1 : index
    %c1_20 = arith.constant 1 : index
    %c0_21 = arith.constant 0 : index
    %7 = vector.load %arg5[%c0_19, %c1, %c1_20, %c0_21] : memref<1x10x10x8xbf16, #tpu.memory_space<vmem>>, vector<1x8x8x8xbf16>
    tpu.vector_store %arg5[%c0_19, %c1, %c1_20, %c0_21], %6 {strides = array<i32>} : memref<1x10x10x8xbf16, #tpu.memory_space<vmem>>, vector<1x8x8x8xbf16>,
    %c0_22 = arith.constant 0 : index
    %c0_23 = arith.constant 0 : index
    %8 = vector.load %arg3[%c0_22, %c0_23] : memref<1x16xf32, #tpu.memory_space<vmem>>, vector<1x16xf32>
    %c0_24 = arith.constant 0 : index
    %c0_25 = arith.constant 0 : index
    %c0_26 = arith.constant 0 : index
    %c0_27 = arith.constant 0 : index
    %9 = vector.load %arg5[%c0_24, %c0_25, %c0_26, %c0_27] : memref<1x10x10x8xbf16, #tpu.memory_space<vmem>>, vector<1x8x8x8xbf16>
    %10 = vector.shape_cast %9 : vector<1x8x8x8xbf16> to vector<64x8xbf16>
    %c0_28 = arith.constant 0 : index
    %c0_29 = arith.constant 0 : index
    %c1_30 = arith.constant 1 : index
    %c0_31 = arith.constant 0 : index
    %11 = vector.load %arg5[%c0_28, %c0_29, %c1_30, %c0_31] : memref<1x10x10x8xbf16, #tpu.memory_space<vmem>>, vector<1x8x8x8xbf16>
    %12 = vector.shape_cast %11 : vector<1x8x8x8xbf16> to vector<64x8xbf16>
    %c0_32 = arith.constant 0 : index
    %c0_33 = arith.constant 0 : index
    %c2 = arith.constant 2 : index
    %c0_34 = arith.constant 0 : index
    %13 = vector.load %arg5[%c0_32, %c0_33, %c2, %c0_34] : memref<1x10x10x8xbf16, #tpu.memory_space<vmem>>, vector<1x8x8x8xbf16>
    %14 = vector.shape_cast %13 : vector<1x8x8x8xbf16> to vector<64x8xbf16>
    %c0_35 = arith.constant 0 : index
    %c1_36 = arith.constant 1 : index
    %c0_37 = arith.constant 0 : index
    %c0_38 = arith.constant 0 : index
    %15 = vector.load %arg5[%c0_35, %c1_36, %c0_37, %c0_38] : memref<1x10x10x8xbf16, #tpu.memory_space<vmem>>, vector<1x8x8x8xbf16>
    %16 = vector.shape_cast %15 : vector<1x8x8x8xbf16> to vector<64x8xbf16>
    %c0_39 = arith.constant 0 : index
    %c1_40 = arith.constant 1 : index
    %c1_41 = arith.constant 1 : index
    %c0_42 = arith.constant 0 : index
    %17 = vector.load %arg5[%c0_39, %c1_40, %c1_41, %c0_42] : memref<1x10x10x8xbf16, #tpu.memory_space<vmem>>, vector<1x8x8x8xbf16>
    %18 = vector.shape_cast %17 : vector<1x8x8x8xbf16> to vector<64x8xbf16>
    %c0_43 = arith.constant 0 : index
    %c1_44 = arith.constant 1 : index
    %c2_45 = arith.constant 2 : index
    %c0_46 = arith.constant 0 : index
    %19 = vector.load %arg5[%c0_43, %c1_44, %c2_45, %c0_46] : memref<1x10x10x8xbf16, #tpu.memory_space<vmem>>, vector<1x8x8x8xbf16>
    %20 = vector.shape_cast %19 : vector<1x8x8x8xbf16> to vector<64x8xbf16>
    %c0_47 = arith.constant 0 : index
    %c2_48 = arith.constant 2 : index
    %c0_49 = arith.constant 0 : index
    %c0_50 = arith.constant 0 : index
    %21 = vector.load %arg5[%c0_47, %c2_48, %c0_49, %c0_50] : memref<1x10x10x8xbf16, #tpu.memory_space<vmem>>, vector<1x8x8x8xbf16>
    %22 = vector.shape_cast %21 : vector<1x8x8x8xbf16> to vector<64x8xbf16>
    %c0_51 = arith.constant 0 : index
    %c2_52 = arith.constant 2 : index
    %c1_53 = arith.constant 1 : index
    %c0_54 = arith.constant 0 : index
    %23 = vector.load %arg5[%c0_51, %c2_52, %c1_53, %c0_54] : memref<1x10x10x8xbf16, #tpu.memory_space<vmem>>, vector<1x8x8x8xbf16>
    %24 = vector.shape_cast %23 : vector<1x8x8x8xbf16> to vector<64x8xbf16>
    %c0_55 = arith.constant 0 : index
    %c2_56 = arith.constant 2 : index
    %c2_57 = arith.constant 2 : index
    %c0_58 = arith.constant 0 : index
    %25 = vector.load %arg5[%c0_55, %c2_56, %c2_57, %c0_58] : memref<1x10x10x8xbf16, #tpu.memory_space<vmem>>, vector<1x8x8x8xbf16>
    %26 = vector.shape_cast %25 : vector<1x8x8x8xbf16> to vector<64x8xbf16>
    %27 = tpu.concatenate %18, %16, %12, %10 in 1 : vector<64x8xbf16>, vector<64x8xbf16>, vector<64x8xbf16>, vector<64x8xbf16> -> vector<64x32xbf16>
    %c0_59 = arith.constant 0 : index
    %c0_60 = arith.constant 0 : index
    %c0_61 = arith.constant 0 : index
    %c0_62 = arith.constant 0 : index
    %28 = vector.load %arg2[%c0_59, %c0_60, %c0_61, %c0_62] : memref<2x2x32x16xbf16, #tpu.memory_space<vmem>>, vector<1x1x32x16xbf16>
    %29 = vector.shape_cast %28 : vector<1x1x32x16xbf16> to vector<32x16xbf16>
    %cst_63 = arith.constant dense<0.000000e+00> : vector<64x16xf32>
    %30 = tpu.matmul %27, %29, %cst_63 {dimension_numbers = #tpu.dot_dimension_numbers<[1], [0], [0], [1], [0, 0, 1, 1], [], []>} : vector<64x32xbf16>, vector<32x16xbf16>, vector<64x16xf32> -> vector<64x16xf32>
    %31 = vector.broadcast %8 : vector<1x16xf32> to vector<64x16xf32>
    %32 = arith.addf %30, %31 : vector<64x16xf32>
    %cst_64 = arith.constant 0.000000e+00 : f32
    %33 = vector.broadcast %cst_64 : f32 to vector<64x16xf32>
    %34 = arith.subf %33, %32 : vector<64x16xf32>
    %35 = math.exp %34 : vector<64x16xf32>
    %cst_65 = arith.constant 1.000000e+00 : f32
    %36 = vector.broadcast %cst_65 : f32 to vector<64x16xf32>
    %37 = arith.addf %36, %35 : vector<64x16xf32>
    %38 = tpu.reciprocal %37 {approx = true} : vector<64x16xf32> -> vector<64x16xf32>
    %39 = arith.mulf %32, %38 : vector<64x16xf32>
    %40 = tpu.concatenate %20, %18, %14, %12 in 1 : vector<64x8xbf16>, vector<64x8xbf16>, vector<64x8xbf16>, vector<64x8xbf16> -> vector<64x32xbf16>
    %c0_66 = arith.constant 0 : index
    %c1_67 = arith.constant 1 : index
    %c0_68 = arith.constant 0 : index
    %c0_69 = arith.constant 0 : index
    %41 = vector.load %arg2[%c0_66, %c1_67, %c0_68, %c0_69] : memref<2x2x32x16xbf16, #tpu.memory_space<vmem>>, vector<1x1x32x16xbf16>
    %42 = vector.shape_cast %41 : vector<1x1x32x16xbf16> to vector<32x16xbf16>
    %cst_70 = arith.constant dense<0.000000e+00> : vector<64x16xf32>
    %43 = tpu.matmul %40, %42, %cst_70 {dimension_numbers = #tpu.dot_dimension_numbers<[1], [0], [0], [1], [0, 0, 1, 1], [], []>} : vector<64x32xbf16>, vector<32x16xbf16>, vector<64x16xf32> -> vector<64x16xf32>
    %44 = vector.broadcast %8 : vector<1x16xf32> to vector<64x16xf32>
    %45 = arith.addf %43, %44 : vector<64x16xf32>
    %cst_71 = arith.constant 0.000000e+00 : f32
    %46 = vector.broadcast %cst_71 : f32 to vector<64x16xf32>
    %47 = arith.subf %46, %45 : vector<64x16xf32>
    %48 = math.exp %47 : vector<64x16xf32>
    %cst_72 = arith.constant 1.000000e+00 : f32
    %49 = vector.broadcast %cst_72 : f32 to vector<64x16xf32>
    %50 = arith.addf %49, %48 : vector<64x16xf32>
    %51 = tpu.reciprocal %50 {approx = true} : vector<64x16xf32> -> vector<64x16xf32>
    %52 = arith.mulf %45, %51 : vector<64x16xf32>
    %53 = tpu.concatenate %39, %52 in 1 : vector<64x16xf32>, vector<64x16xf32> -> vector<64x32xf32>
    %54 = vector.shape_cast %53 : vector<64x32xf32> to vector<1x8x1x8x32xf32>
    %55 = tpu.concatenate %24, %22, %18, %16 in 1 : vector<64x8xbf16>, vector<64x8xbf16>, vector<64x8xbf16>, vector<64x8xbf16> -> vector<64x32xbf16>
    %c1_73 = arith.constant 1 : index
    %c0_74 = arith.constant 0 : index
    %c0_75 = arith.constant 0 : index
    %c0_76 = arith.constant 0 : index
    %56 = vector.load %arg2[%c1_73, %c0_74, %c0_75, %c0_76] : memref<2x2x32x16xbf16, #tpu.memory_space<vmem>>, vector<1x1x32x16xbf16>
    %57 = vector.shape_cast %56 : vector<1x1x32x16xbf16> to vector<32x16xbf16>
    %cst_77 = arith.constant dense<0.000000e+00> : vector<64x16xf32>
    %58 = tpu.matmul %55, %57, %cst_77 {dimension_numbers = #tpu.dot_dimension_numbers<[1], [0], [0], [1], [0, 0, 1, 1], [], []>} : vector<64x32xbf16>, vector<32x16xbf16>, vector<64x16xf32> -> vector<64x16xf32>
    %59 = vector.broadcast %8 : vector<1x16xf32> to vector<64x16xf32>
    %60 = arith.addf %58, %59 : vector<64x16xf32>
    %cst_78 = arith.constant 0.000000e+00 : f32
    %61 = vector.broadcast %cst_78 : f32 to vector<64x16xf32>
    %62 = arith.subf %61, %60 : vector<64x16xf32>
    %63 = math.exp %62 : vector<64x16xf32>
    %cst_79 = arith.constant 1.000000e+00 : f32
    %64 = vector.broadcast %cst_79 : f32 to vector<64x16xf32>
    %65 = arith.addf %64, %63 : vector<64x16xf32>
    %66 = tpu.reciprocal %65 {approx = true} : vector<64x16xf32> -> vector<64x16xf32>
    %67 = arith.mulf %60, %66 : vector<64x16xf32>
    %68 = tpu.concatenate %26, %24, %20, %18 in 1 : vector<64x8xbf16>, vector<64x8xbf16>, vector<64x8xbf16>, vector<64x8xbf16> -> vector<64x32xbf16>
    %c1_80 = arith.constant 1 : index
    %c1_81 = arith.constant 1 : index
    %c0_82 = arith.constant 0 : index
    %c0_83 = arith.constant 0 : index
    %69 = vector.load %arg2[%c1_80, %c1_81, %c0_82, %c0_83] : memref<2x2x32x16xbf16, #tpu.memory_space<vmem>>, vector<1x1x32x16xbf16>
    %70 = vector.shape_cast %69 : vector<1x1x32x16xbf16> to vector<32x16xbf16>
    %cst_84 = arith.constant dense<0.000000e+00> : vector<64x16xf32>
    %71 = tpu.matmul %68, %70, %cst_84 {dimension_numbers = #tpu.dot_dimension_numbers<[1], [0], [0], [1], [0, 0, 1, 1], [], []>} : vector<64x32xbf16>, vector<32x16xbf16>, vector<64x16xf32> -> vector<64x16xf32>
    %72 = vector.broadcast %8 : vector<1x16xf32> to vector<64x16xf32>
    %73 = arith.addf %71, %72 : vector<64x16xf32>
    %cst_85 = arith.constant 0.000000e+00 : f32
    %74 = vector.broadcast %cst_85 : f32 to vector<64x16xf32>
    %75 = arith.subf %74, %73 : vector<64x16xf32>
    %76 = math.exp %75 : vector<64x16xf32>
    %cst_86 = arith.constant 1.000000e+00 : f32
    %77 = vector.broadcast %cst_86 : f32 to vector<64x16xf32>
    %78 = arith.addf %77, %76 : vector<64x16xf32>
    %79 = tpu.reciprocal %78 {approx = true} : vector<64x16xf32> -> vector<64x16xf32>
    %80 = arith.mulf %73, %79 : vector<64x16xf32>
    %81 = tpu.concatenate %67, %80 in 1 : vector<64x16xf32>, vector<64x16xf32> -> vector<64x32xf32>
    %82 = vector.shape_cast %81 : vector<64x32xf32> to vector<1x8x1x8x32xf32>
    %83 = tpu.concatenate %54, %82 in 2 : vector<1x8x1x8x32xf32>, vector<1x8x1x8x32xf32> -> vector<1x8x2x8x32xf32>
    %c0_87 = arith.constant 0 : index
    %c0_88 = arith.constant 0 : index
    %c0_89 = arith.constant 0 : index
    %c0_90 = arith.constant 0 : index
    %c0_91 = arith.constant 0 : index
    %84 = vector.load %arg4[%c0_87, %c0_88, %c0_89, %c0_90, %c0_91] : memref<1x8x2x8x32xf32, #tpu.memory_space<vmem>>, vector<1x8x2x8x32xf32>
    tpu.vector_store %arg4[%c0_87, %c0_88, %c0_89, %c0_90, %c0_91], %83 {strides = array<i32>} : memref<1x8x2x8x32xf32, #tpu.memory_space<vmem>>, vector<1x8x2x8x32xf32>,
    return
  }
  func.func @transform_0(%arg0: i32) -> (i32, i32, i32, i32) {
    %c0_i32 = arith.constant 0 : i32
    %c0_i32_0 = arith.constant 0 : i32
    %c0_i32_1 = arith.constant 0 : i32
    %c0_i32_2 = arith.constant 0 : i32
    return %arg0, %c0_i32, %c0_i32_0, %c0_i32_1 : i32, i32, i32, i32
  }
  func.func @transform_1(%arg0: i32) -> (i32, i32, i32, i32) {
    %c0_i32 = arith.constant 0 : i32
    %c0_i32_0 = arith.constant 0 : i32
    %c0_i32_1 = arith.constant 0 : i32
    %c0_i32_2 = arith.constant 0 : i32
    %c0_i32_3 = arith.constant 0 : i32
    return %c0_i32, %c0_i32_0, %c0_i32_1, %c0_i32_2 : i32, i32, i32, i32
  }
  func.func @transform_2(%arg0: i32) -> (i32, i32) {
    %c0_i32 = arith.constant 0 : i32
    %c0_i32_0 = arith.constant 0 : i32
    %c0_i32_1 = arith.constant 0 : i32
    return %c0_i32, %c0_i32_0 : i32, i32
  }
  func.func @transform_3(%arg0: i32) -> (i32, i32, i32, i32, i32) {
    %c0_i32 = arith.constant 0 : i32
    %c0_i32_0 = arith.constant 0 : i32
    %c0_i32_1 = arith.constant 0 : i32
    %c0_i32_2 = arith.constant 0 : i32
    %c0_i32_3 = arith.constant 0 : i32
    return %arg0, %c0_i32, %c0_i32_0, %c0_i32_1, %c0_i32_2 : i32, i32, i32, i32, i32
  }
}

</mosaic_0001>

<llo_original>
// kernel: tpu_custom_call.1
$region0: #{tpu_custom_call.1}
  #allocation0 [shape = 'u32[]', space=smem, size = 0x4, offset = 0x4, fixed_abs, tag = 'smem constant byte address 0x4 - core index']
  #allocation1 [shape = 'u32[144,128]{1,0:T(1,128)}', space=vmem, size = 0x12000, scoped, tag = 'internal scratch']
  #allocation2 [shape = 'bf16[1,10,10,8]{3,2,1,0:T(8,128)(2,1)}', space=vmem, size = 0xa000, scoped, tag = 'scratch operand']
  %s0 = inlined_call_operand.hbm [shape: bf16[6,8,8,8], index: 0, kind: input, shape index: {}]
  %s1 = inlined_call_operand.vmem [shape: bf16[2,2,32,16], index: 1, kind: input, shape index: {}]
  %s2 = inlined_call_operand.vmem [shape: f32[1,16], index: 2, kind: input, shape index: {}]
  %s3 = inlined_call_operand.hbm [shape: f32[6,8,2,8,32], index: 3, kind: output, shape index: {}]
  %s4 = sld [smem:[#allocation0]]
  $region49: #{tpu_custom_call.1} parent=0
    _
  %s6 = ssub.s32 1, %s4
  %s7 = scalar_select 0, %s6, %s4
  $region1: #{tpu_custom_call.1} parent=0
    #allocation3 [shape = 'u8[32768]{0}', space=vmem, size = 0x8000, scoped, tag = 'input window, operand 0']
    #allocation4 [shape = 's32[2]{0}', space=sflag, size = 0x8, scoped, tag = 'scoped memory for tpu_custom_call.1']
    #allocation5 [shape = 's32[2]{0}', space=sflag, size = 0x8, scoped, tag = 'scoped memory for tpu_custom_call.1']
    #allocation6 [shape = 'u8[131072]{0}', space=vmem, size = 0x20000, scoped, tag = 'output window, operand 0']
    %8 = vsyncpa [#allocation4], 0
    %s9 = scalar_lea.sflag [#allocation4], 1
    %10 = vsyncpa %s9, 0
    %11 = vsyncpa [#allocation5], 0
    %s12 = scalar_lea.sflag [#allocation5], 1
    %13 = vsyncpa %s12, 0
    loop: start=0, step=1, limit=8
    $region2: #{tpu_custom_call.1} parent=1 // loop_pre_header
      _
    $region3: #{tpu_custom_call.1} parent=1 // loop_header
      %s15 = sphi 0, %s19
      %p16 = scmp.ge.s32.totalorder %s15, 8
      %s25 = sphi 0, %s27
      %s28 = sphi 0, %s25
      %s29 = sphi 0, %s28
      %s45 = sphi 0, %s29
      %s49 = sphi 0, %s49
      %s51 = sphi 0, %s49
      %s52 = sphi 0, %s51
      %s66 = sphi 0, %s52
      %s70 = sphi 0, %s70
      %s72 = sphi 0, %s70
      %s73 = sphi 0, %s72
      %s87 = sphi 0, %s73
      %s93 = sphi 0, %s95
      %s96 = sphi 0, %s93
      %s97 = sphi 0, %s96
      %s113 = sphi 0, %s97
    $region4: #{tpu_custom_call.1} parent=1 // loop_header_branch
      %18 = sbr.rel (%p16) target = $region8
    $region5: #{tpu_custom_call.1} parent=1 // loop_body
      %s20 = ssub.s32 %s15, 1
      %s21 = ssub.s32 %s15, 2
      %s22 = sadd.s32 %s15, 1
      %s23 = ssub.s32 %s15, %s22
      %p24 = scmp.eq.s32.totalorder %s23, 0
      %s26 = sadd.s32 %s25, 1
      %s27 = scalar_select %p24, %s25, %s26
      %p30 = pneg %p24
      %p31 = scmp.eq.s32.totalorder %s15, 5
      %p32 = por %p30, %p31
      %p33 = scmp.ne.s32.totalorder %s25, %s28
      %p34 = scmp.eq.s32.totalorder %s15, 0
      %p35 = por %p33, %p34
      %p36 = scmp.ne.s32.totalorder %s25, %s28
      %p37 = scmp.eq.s32.totalorder %s20, 5
      %p38 = por %p36, %p37
      %p39 = scmp.ne.s32.totalorder %s28, %s29
      %p40 = scmp.eq.s32.totalorder %s20, 0
      %p41 = por %p39, %p40
      %p42 = scmp.ne.s32.totalorder %s28, %s29
      %p43 = scmp.eq.s32.totalorder %s21, 5
      %p44 = por %p42, %p43
      %p46 = scmp.ne.s32.totalorder %s29, %s45
      %p47 = scmp.eq.s32.totalorder %s21, 0
      %p48 = por %p46, %p47
      %s50 = sadd.s32 %s49, 1
      %p53 = scmp.eq.s32.totalorder %s15, 5
      %p54 = scmp.ne.s32.totalorder %s49, %s51
      %p55 = scmp.eq.s32.totalorder %s15, 0
      %p56 = por %p54, %p55
      %p57 = scmp.ne.s32.totalorder %s49, %s51
      %p58 = scmp.eq.s32.totalorder %s20, 5
      %p59 = por %p57, %p58
      %p60 = scmp.ne.s32.totalorder %s51, %s52
      %p61 = scmp.eq.s32.totalorder %s20, 0
      %p62 = por %p60, %p61
      %p63 = scmp.ne.s32.totalorder %s51, %s52
      %p64 = scmp.eq.s32.totalorder %s21, 5
      %p65 = por %p63, %p64
      %p67 = scmp.ne.s32.totalorder %s52, %s66
      %p68 = scmp.eq.s32.totalorder %s21, 0
      %p69 = por %p67, %p68
      %s71 = sadd.s32 %s70, 1
      %p74 = scmp.eq.s32.totalorder %s15, 5
      %p75 = scmp.ne.s32.totalorder %s70, %s72
      %p76 = scmp.eq.s32.totalorder %s15, 0
      %p77 = por %p75, %p76
      %p78 = scmp.ne.s32.totalorder %s70, %s72
      %p79 = scmp.eq.s32.totalorder %s20, 5
      %p80 = por %p78, %p79
      %p81 = scmp.ne.s32.totalorder %s72, %s73
      %p82 = scmp.eq.s32.totalorder %s20, 0
      %p83 = por %p81, %p82
      %p84 = scmp.ne.s32.totalorder %s72, %s73
      %p85 = scmp.eq.s32.totalorder %s21, 5
      %p86 = por %p84, %p85
      %p88 = scmp.ne.s32.totalorder %s73, %s87
      %p89 = scmp.eq.s32.totalorder %s21, 0
      %p90 = por %p88, %p89
      %s91 = ssub.s32 %s15, %s22
      %p92 = scmp.eq.s32.totalorder %s91, 0
      %s94 = sadd.s32 %s93, 1
      %s95 = scalar_select %p92, %s93, %s94
      %p98 = pneg %p92
      %p99 = scmp.eq.s32.totalorder %s15, 5
      %p100 = por %p98, %p99
      %p101 = scmp.ne.s32.totalorder %s93, %s96
      %p102 = scmp.eq.s32.totalorder %s15, 0
      %p103 = por %p101, %p102
      %p104 = scmp.ne.s32.totalorder %s93, %s96
      %p105 = scmp.eq.s32.totalorder %s20, 5
      %p106 = por %p104, %p105
      %p107 = scmp.ne.s32.totalorder %s96, %s97
      %p108 = scmp.eq.s32.totalorder %s20, 0
      %p109 = por %p107, %p108
      %p110 = scmp.ne.s32.totalorder %s96, %s97
      %p111 = scmp.eq.s32.totalorder %s21, 5
      %p112 = por %p110, %p111
      %p114 = scmp.ne.s32.totalorder %s97, %s113
      %p115 = scmp.eq.s32.totalorder %s21, 0
      %p116 = por %p114, %p115
      %p117 = scmp.le.s32.totalorder 1, %s15
      %p118 = scmp.lt.s32.totalorder %s15, 7
      %p119 = pnand %p117, %p118
      %p120 = pneg %p119
      // Predicated region
      $region9: #{tpu_custom_call.1} parent=5 // pred_check
        _
      $region10: #{tpu_custom_call.1} parent=5 // pred_check_branch
        %122 = sbr.rel (%p119) target = $region12
      $region11: #{tpu_custom_call.1} parent=5 // pred_region
        %s123 = ssub.s32 %s15, 1
        // Predicated region
        $region13: #{tpu_custom_call.1} parent=11 // pred_check
          %p124 = pneg %p62
        $region14: #{tpu_custom_call.1} parent=11 // pred_check_branch
          %126 = sbr.rel (%p124) target = $region16
        $region15: #{tpu_custom_call.1} parent=11 // pred_region
          _
        $region16: #{tpu_custom_call.1} parent=11 // pred_fallthru
          _
        // Predicated region
        $region17: #{tpu_custom_call.1} parent=11 // pred_check
          %p127 = pneg %p83
        $region18: #{tpu_custom_call.1} parent=11 // pred_check_branch
          %129 = sbr.rel (%p127) target = $region20
        $region19: #{tpu_custom_call.1} parent=11 // pred_region
          _
        $region20: #{tpu_custom_call.1} parent=11 // pred_fallthru
          _
      $region12: #{tpu_custom_call.1} parent=5 // pred_fallthru
        _
      %p130 = scmp.lt.s32.totalorder %s15, 6
      // Predicated region
      $region21: #{tpu_custom_call.1} parent=5 // pred_check
        %p131 = pneg %p130
      $region22: #{tpu_custom_call.1} parent=5 // pred_check_branch
        %133 = sbr.rel (%p131) target = $region24
      $region23: #{tpu_custom_call.1} parent=5 // pred_region
        // Predicated region
        $region25: #{tpu_custom_call.1} parent=23 // pred_check
          %p134 = pneg %p35
        $region26: #{tpu_custom_call.1} parent=23 // pred_check_branch
          %136 = sbr.rel (%p134) target = $region28
        $region27: #{tpu_custom_call.1} parent=23 // pred_region
          %s137 = sand.u32 %s25, 1
          %s138 = scalar_lea.sflag [#allocation4], %s137
          %s139 = sand.u32 %s25, 1
          %s140 = smul.addr %s139, 32
          %s141 = scalar_lea.vmem [#allocation3], %s140
          %s143 = ssub.s32 512, 512
          %144 = vsyncadd %s138, %s143
          %s145 = smul.addr %s15, 8
          %s146 = smul.addr %s145, 64
          %s147 = scalar_lea.hbm %s0, %s146
          %s148 = sshll.u32 %s141, 4
          %s149 = int_to_ptr.vmem [resolvable:$true] %s148
          %154 = dma.hbm_to_vmem [thread:$0]  %s147, 512, %s149, %s138, 64, 64, 4
        $region28: #{tpu_custom_call.1} parent=23 // pred_fallthru
          _
      $region24: #{tpu_custom_call.1} parent=5 // pred_fallthru
        _
      %p155 = scmp.le.s32.totalorder 1, %s15
      %p156 = scmp.lt.s32.totalorder %s15, 7
      %p157 = pnand %p155, %p156
      %p158 = pneg %p157
      // Predicated region
      $region29: #{tpu_custom_call.1} parent=5 // pred_check
        _
      $region30: #{tpu_custom_call.1} parent=5 // pred_check_branch
        %160 = sbr.rel (%p157) target = $region32
      $region31: #{tpu_custom_call.1} parent=5 // pred_region
        %s161 = ssub.s32 %s15, 1
        %s162 = sand.u32 %s28, 1
        %s163 = scalar_lea.sflag [#allocation4], %s162
        %s164 = sand.u32 %s28, 1
        %s165 = smul.addr %s164, 32
        %s166 = scalar_lea.vmem [#allocation3], %s165
        // Predicated region
        $region33: #{tpu_custom_call.1} parent=31 // pred_check
          %p167 = pneg %p41
        $region34: #{tpu_custom_call.1} parent=31 // pred_check_branch
          %169 = sbr.rel (%p167) target = $region36
        $region35: #{tpu_custom_call.1} parent=31 // pred_region
          %170 = dma.done %s163, 512
        $region36: #{tpu_custom_call.1} parent=31 // pred_fallthru
          _
        %s171 = sand.u32 %s28, 1
        %s172 = scalar_lea.sflag [#allocation4], %s171
        %s173 = sand.u32 %s28, 1
        %s174 = smul.addr %s173, 32
        %s175 = scalar_lea.vmem [#allocation3], %s174
        %p176 = pneg %p41
        %p177 = pneg %p38
        %p178 = pneg %p62
        %p179 = pneg %p59
        %p180 = pneg %p83
        %p181 = pneg %p80
        %p182 = pneg %p109
        %p183 = pneg %p106
        %s184 = sand.u32 %s96, 1
        %s185 = scalar_lea.sflag [#allocation5], %s184
        %s186 = sand.u32 %s96, 1
        %s187 = smul.addr %s186, 128
        %s188 = scalar_lea.vmem [#allocation6], %s187
        %vm190 = vcmask 60416
        %191 = vst.msk [vmem:[#allocation2] sm:$0xf] %vm190, 0
        %vm192 = vcmask 57344
        %193 = vst.msk [vmem:[#allocation2 + $0x4] sm:$0x1] %vm192, 0
        %s194 = scalar_lea.vmem [#allocation2], 72
        %195 = vst.msk [vmem:[%s194] sm:$0xf] %vm190, 0
        %196 = vst.msk [vmem:[%s194 + $0x4] sm:$0x1] %vm192, 0
        %vm197 = vcmask 57344
        %vm198 = vsmask.f32 256
        %vm199 = vmand %vm197, %vm198
        %v200 = vld [vmem:[#allocation2] sm:$0x1]
        %v201 = vsel %vm199, 0, %v200
        %202 = vst [vmem:[#allocation2] sm:$0x1] %v201
        %v203 = vld [vmem:[#allocation2 + $0x8] sm:$0x1]
        %v204 = vsel %vm199, 0, %v203
        %205 = vst [vmem:[#allocation2 + $0x8] sm:$0x1] %v204
        %v206 = vld [vmem:[#allocation2 + $0x10] sm:$0x1]
        %v207 = vsel %vm199, 0, %v206
        %208 = vst [vmem:[#allocation2 + $0x10] sm:$0x1] %v207
        %v209 = vld [vmem:[#allocation2 + $0x18] sm:$0x1]
        %v210 = vsel %vm199, 0, %v209
        %211 = vst [vmem:[#allocation2 + $0x18] sm:$0x1] %v210
        %v212 = vld [vmem:[#allocation2 + $0x20] sm:$0x1]
        %v213 = vsel %vm199, 0, %v212
        %214 = vst [vmem:[#allocation2 + $0x20] sm:$0x1] %v213
        %v215 = vld [vmem:[#allocation2 + $0x28] sm:$0x1]
        %v216 = vsel %vm199, 0, %v215
        %217 = vst [vmem:[#allocation2 + $0x28] sm:$0x1] %v216
        %v218 = vld [vmem:[#allocation2 + $0x30] sm:$0x1]
        %v219 = vsel %vm199, 0, %v218
        %220 = vst [vmem:[#allocation2 + $0x30] sm:$0x1] %v219
        %v221 = vld [vmem:[#allocation2 + $0x38] sm:$0x1]
        %v222 = vsel %vm199, 0, %v221
        %223 = vst [vmem:[#allocation2 + $0x38] sm:$0x1] %v222
        %v224 = vld [vmem:[#allocation2 + $0x40] sm:$0x1]
        %v225 = vsel %vm199, 0, %v224
        %226 = vst [vmem:[#allocation2 + $0x40] sm:$0x1] %v225
        %v227 = vld [vmem:[#allocation2 + $0x48] sm:$0x1]
        %v228 = vsel %vm199, 0, %v227
        %229 = vst [vmem:[#allocation2 + $0x48] sm:$0x1] %v228
        %vm230 = vsmask.f32 7938
        %vm231 = vmand %vm197, %vm230
        %v232 = vld [vmem:[#allocation2 + $0x4] sm:$0x1]
        %v233 = vsel %vm231, 0, %v232
        %234 = vst [vmem:[#allocation2 + $0x4] sm:$0x1] %v233
        %v235 = vld [vmem:[#allocation2 + $0xc] sm:$0x1]
        %v236 = vsel %vm231, 0, %v235
        %237 = vst [vmem:[#allocation2 + $0xc] sm:$0x1] %v236
        %v238 = vld [vmem:[#allocation2 + $0x14] sm:$0x1]
        %v239 = vsel %vm231, 0, %v238
        %240 = vst [vmem:[#allocation2 + $0x14] sm:$0x1] %v239
        %v241 = vld [vmem:[#allocation2 + $0x1c] sm:$0x1]
        %v242 = vsel %vm231, 0, %v241
        %243 = vst [vmem:[#allocation2 + $0x1c] sm:$0x1] %v242
        %v244 = vld [vmem:[#allocation2 + $0x24] sm:$0x1]
        %v245 = vsel %vm231, 0, %v244
        %246 = vst [vmem:[#allocation2 + $0x24] sm:$0x1] %v245
        %v247 = vld [vmem:[#allocation2 + $0x2c] sm:$0x1]
        %v248 = vsel %vm231, 0, %v247
        %249 = vst [vmem:[#allocation2 + $0x2c] sm:$0x1] %v248
        %v250 = vld [vmem:[#allocation2 + $0x34] sm:$0x1]
        %v251 = vsel %vm231, 0, %v250
        %252 = vst [vmem:[#allocation2 + $0x34] sm:$0x1] %v251
        %v253 = vld [vmem:[#allocation2 + $0x3c] sm:$0x1]
        %v254 = vsel %vm231, 0, %v253
        %255 = vst [vmem:[#allocation2 + $0x3c] sm:$0x1] %v254
        %v256 = vld [vmem:[#allocation2 + $0x44] sm:$0x1]
        %v257 = vsel %vm231, 0, %v256
        %258 = vst [vmem:[#allocation2 + $0x44] sm:$0x1] %v257
        %v259 = vld [vmem:[#allocation2 + $0x4c] sm:$0x1]
        %v260 = vsel %vm231, 0, %v259
        %261 = vst [vmem:[#allocation2 + $0x4c] sm:$0x1] %v260
        %v262 = vld [vmem:[%s166] sm:$0xf]
        %v263 = vld [vmem:[%s166 + $0x4] sm:$0xf]
        %v264 = vld [vmem:[%s166 + $0x8] sm:$0xf]
        %v265 = vld [vmem:[%s166 + $0xc] sm:$0xf]
        %v266 = vld [vmem:[%s166 + $0x10] sm:$0xf]
        %v267 = vld [vmem:[%s166 + $0x14] sm:$0xf]
        %v268 = vld [vmem:[%s166 + $0x18] sm:$0xf]
        %v269 = vld [vmem:[%s166 + $0x1c] sm:$0xf]
        %v271 = vshrl.u32 %v262, 16
        %v273 = vrot.slane %v271, 7
        %v274 = vshll.u32 %v262, 16
        %v276 = vor.u32 %v273, %v274
        %v277 = vrot.slane %v273, 4
        %v279 = vshrl.u32 %v263, 16
        %v281 = vrot.slane %v279, 7
        %v282 = vshll.u32 %v263, 16
        %v284 = vor.u32 %v281, %v282
        %v285 = vrot.slane %v281, 4
        %v287 = vshrl.u32 %v264, 16
        %v289 = vrot.slane %v287, 7
        %v290 = vshll.u32 %v264, 16
        %v292 = vor.u32 %v289, %v290
        %v293 = vrot.slane %v289, 4
        %v295 = vshrl.u32 %v265, 16
        %v297 = vrot.slane %v295, 7
        %v298 = vshll.u32 %v265, 16
        %v300 = vor.u32 %v297, %v298
        %v301 = vrot.slane %v297, 4
        %v303 = vshrl.u32 %v266, 16
        %v305 = vrot.slane %v303, 7
        %v306 = vshll.u32 %v266, 16
        %v308 = vor.u32 %v305, %v306
        %v309 = vrot.slane %v305, 4
        %v311 = vshrl.u32 %v267, 16
        %v313 = vrot.slane %v311, 7
        %v314 = vshll.u32 %v267, 16
        %v316 = vor.u32 %v313, %v314
        %v317 = vrot.slane %v313, 4
        %v319 = vshrl.u32 %v268, 16
        %v321 = vrot.slane %v319, 7
        %v322 = vshll.u32 %v268, 16
        %v324 = vor.u32 %v321, %v322
        %v325 = vrot.slane %v321, 4
        %v327 = vshrl.u32 %v269, 16
        %v329 = vrot.slane %v327, 7
        %v330 = vshll.u32 %v269, 16
        %v332 = vor.u32 %v329, %v330
        %v333 = vrot.slane %v329, 4
        %s350 = scalar_lea.vmem [#allocation2], 8
        %vm351 = vcmask 60416
        %vm352 = vmand %vm351, %vm230
        %v353 = vld [vmem:[%s350] sm:$0xf]
        %v354 = vsel %vm352, %v276, %v353
        %355 = vst [vmem:[%s350] sm:$0xf] %v354
        %v356 = vld [vmem:[%s350 + $0x4] sm:$0x1]
        %v357 = vsel %vm199, %v277, %v356
        %358 = vst [vmem:[%s350 + $0x4] sm:$0x1] %v357
        %v359 = vld [vmem:[%s350 + $0x8] sm:$0xf]
        %v360 = vsel %vm352, %v284, %v359
        %361 = vst [vmem:[%s350 + $0x8] sm:$0xf] %v360
        %v362 = vld [vmem:[%s350 + $0xc] sm:$0x1]
        %v363 = vsel %vm199, %v285, %v362
        %364 = vst [vmem:[%s350 + $0xc] sm:$0x1] %v363
        %v365 = vld [vmem:[%s350 + $0x10] sm:$0xf]
        %v366 = vsel %vm352, %v292, %v365
        %367 = vst [vmem:[%s350 + $0x10] sm:$0xf] %v366
        %v368 = vld [vmem:[%s350 + $0x14] sm:$0x1]
        %v369 = vsel %vm199, %v293, %v368
        %370 = vst [vmem:[%s350 + $0x14] sm:$0x1] %v369
        %v371 = vld [vmem:[%s350 + $0x18] sm:$0xf]
        %v372 = vsel %vm352, %v300, %v371
        %373 = vst [vmem:[%s350 + $0x18] sm:$0xf] %v372
        %v374 = vld [vmem:[%s350 + $0x1c] sm:$0x1]
        %v375 = vsel %vm199, %v301, %v374
        %376 = vst [vmem:[%s350 + $0x1c] sm:$0x1] %v375
        %v377 = vld [vmem:[%s350 + $0x20] sm:$0xf]
        %v378 = vsel %vm352, %v308, %v377
        %379 = vst [vmem:[%s350 + $0x20] sm:$0xf] %v378
        %v380 = vld [vmem:[%s350 + $0x24] sm:$0x1]
        %v381 = vsel %vm199, %v309, %v380
        %382 = vst [vmem:[%s350 + $0x24] sm:$0x1] %v381
        %v383 = vld [vmem:[%s350 + $0x28] sm:$0xf]
        %v384 = vsel %vm352, %v316, %v383
        %385 = vst [vmem:[%s350 + $0x28] sm:$0xf] %v384
        %v386 = vld [vmem:[%s350 + $0x2c] sm:$0x1]
        %v387 = vsel %vm199, %v317, %v386
        %388 = vst [vmem:[%s350 + $0x2c] sm:$0x1] %v387
        %v389 = vld [vmem:[%s350 + $0x30] sm:$0xf]
        %v390 = vsel %vm352, %v324, %v389
        %391 = vst [vmem:[%s350 + $0x30] sm:$0xf] %v390
        %v392 = vld [vmem:[%s350 + $0x34] sm:$0x1]
        %v393 = vsel %vm199, %v325, %v392
        %394 = vst [vmem:[%s350 + $0x34] sm:$0x1] %v393
        %v395 = vld [vmem:[%s350 + $0x38] sm:$0xf]
        %v396 = vsel %vm352, %v332, %v395
        %397 = vst [vmem:[%s350 + $0x38] sm:$0xf] %v396
        %v398 = vld [vmem:[%s350 + $0x3c] sm:$0x1]
        %v399 = vsel %vm199, %v333, %v398
        %400 = vst [vmem:[%s350 + $0x3c] sm:$0x1] %v399
        %v401 = vld [vmem:[%s2] sm:$0x1]
        %v402 = vld [vmem:[#allocation2] sm:$0xf]
        %v403 = vld [vmem:[#allocation2 + $0x8] sm:$0xf]
        %v404 = vld [vmem:[#allocation2 + $0x10] sm:$0xf]
        %v405 = vld [vmem:[#allocation2 + $0x18] sm:$0xf]
        %v406 = vld [vmem:[#allocation2 + $0x20] sm:$0xf]
        %v407 = vld [vmem:[#allocation2 + $0x28] sm:$0xf]
        %v408 = vld [vmem:[#allocation2 + $0x30] sm:$0xf]
        %v409 = vld [vmem:[#allocation2 + $0x38] sm:$0xf]
        %v410 = vld [vmem:[#allocation2 + $0x4] sm:$0x1]
        %v411 = vld [vmem:[#allocation2 + $0xc] sm:$0x1]
        %v412 = vld [vmem:[#allocation2 + $0x14] sm:$0x1]
        %v413 = vld [vmem:[#allocation2 + $0x1c] sm:$0x1]
        %v414 = vld [vmem:[#allocation2 + $0x24] sm:$0x1]
        %v415 = vld [vmem:[#allocation2 + $0x2c] sm:$0x1]
        %v416 = vld [vmem:[#allocation2 + $0x34] sm:$0x1]
        %v417 = vld [vmem:[#allocation2 + $0x3c] sm:$0x1]
        %vm418 = vsmask.f32 3328
        %vm419 = vsmask.f32 7440
        %vm420 = vmor %vm418, %vm419
        %v422 = vshrl.u32 %v402, 16
        %v424 = vrot.slane %v422, 4
        %v425 = vshll.u32 %v402, 16
        %v427 = vrot.slane %v425, 5
        %v428 = vor.u32 %v424, %v427
        %v429 = vrot.slane %v428, 4
        %v431 = vshll.u32 %v410, 16
        %v433 = vrot.slane %v431, 5
        %v434 = vsel %vm420, %v429, %v433
        %v436 = vshrl.u32 %v403, 16
        %v438 = vrot.slane %v436, 4
        %v439 = vshll.u32 %v403, 16
        %v441 = vrot.slane %v439, 5
        %v442 = vor.u32 %v438, %v441
        %v443 = vrot.slane %v442, 4
        %v445 = vshll.u32 %v411, 16
        %v447 = vrot.slane %v445, 5
        %v448 = vsel %vm420, %v443, %v447
        %v450 = vshrl.u32 %v404, 16
        %v452 = vrot.slane %v450, 4
        %v453 = vshll.u32 %v404, 16
        %v455 = vrot.slane %v453, 5
        %v456 = vor.u32 %v452, %v455
        %v457 = vrot.slane %v456, 4
        %v459 = vshll.u32 %v412, 16
        %v461 = vrot.slane %v459, 5
        %v462 = vsel %vm420, %v457, %v461
        %v464 = vshrl.u32 %v405, 16
        %v466 = vrot.slane %v464, 4
        %v467 = vshll.u32 %v405, 16
        %v469 = vrot.slane %v467, 5
        %v470 = vor.u32 %v466, %v469
        %v471 = vrot.slane %v470, 4
        %v473 = vshll.u32 %v413, 16
        %v475 = vrot.slane %v473, 5
        %v476 = vsel %vm420, %v471, %v475
        %v478 = vshrl.u32 %v406, 16
        %v480 = vrot.slane %v478, 4
        %v481 = vshll.u32 %v406, 16
        %v483 = vrot.slane %v481, 5
        %v484 = vor.u32 %v480, %v483
        %v485 = vrot.slane %v484, 4
        %v487 = vshll.u32 %v414, 16
        %v489 = vrot.slane %v487, 5
        %v490 = vsel %vm420, %v485, %v489
        %v492 = vshrl.u32 %v407, 16
        %v494 = vrot.slane %v492, 4
        %v495 = vshll.u32 %v407, 16
        %v497 = vrot.slane %v495, 5
        %v498 = vor.u32 %v494, %v497
        %v499 = vrot.slane %v498, 4
        %v501 = vshll.u32 %v415, 16
        %v503 = vrot.slane %v501, 5
        %v504 = vsel %vm420, %v499, %v503
        %v506 = vshrl.u32 %v408, 16
        %v508 = vrot.slane %v506, 4
        %v509 = vshll.u32 %v408, 16
        %v511 = vrot.slane %v509, 5
        %v512 = vor.u32 %v508, %v511
        %v513 = vrot.slane %v512, 4
        %v515 = vshll.u32 %v416, 16
        %v517 = vrot.slane %v515, 5
        %v518 = vsel %vm420, %v513, %v517
        %v520 = vshrl.u32 %v409, 16
        %v522 = vrot.slane %v520, 4
        %v523 = vshll.u32 %v409, 16
        %v525 = vrot.slane %v523, 5
        %v526 = vor.u32 %v522, %v525
        %v527 = vrot.slane %v526, 4
        %v529 = vshll.u32 %v417, 16
        %v531 = vrot.slane %v529, 5
        %v532 = vsel %vm420, %v527, %v531
        %v533 = vld [vmem:[#allocation2] sm:$0xe]
        %v534 = vld [vmem:[#allocation2 + $0x8] sm:$0xe]
        %v535 = vld [vmem:[#allocation2 + $0x10] sm:$0xe]
        %v536 = vld [vmem:[#allocation2 + $0x18] sm:$0xe]
        %v537 = vld [vmem:[#allocation2 + $0x20] sm:$0xe]
        %v538 = vld [vmem:[#allocation2 + $0x28] sm:$0xe]
        %v539 = vld [vmem:[#allocation2 + $0x30] sm:$0xe]
        %v540 = vld [vmem:[#allocation2 + $0x38] sm:$0xe]
        %vm557 = vcmask 1042432
        %vm558 = vcmask 1046532
        %vm559 = vmor %vm557, %vm558
        %v560 = vrot.slane %v533, 5
        %v561 = vrot.slane %v560, 4
        %v562 = vrot.slane %v410, 5
        %v563 = vsel %vm559, %v561, %v562
        %v564 = vrot.slane %v534, 5
        %v565 = vrot.slane %v564, 4
        %v566 = vrot.slane %v411, 5
        %v567 = vsel %vm559, %v565, %v566
        %v568 = vrot.slane %v535, 5
        %v569 = vrot.slane %v568, 4
        %v570 = vrot.slane %v412, 5
        %v571 = vsel %vm559, %v569, %v570
        %v572 = vrot.slane %v536, 5
        %v573 = vrot.slane %v572, 4
        %v574 = vrot.slane %v413, 5
        %v575 = vsel %vm559, %v573, %v574
        %v576 = vrot.slane %v537, 5
        %v577 = vrot.slane %v576, 4
        %v578 = vrot.slane %v414, 5
        %v579 = vsel %vm559, %v577, %v578
        %v580 = vrot.slane %v538, 5
        %v581 = vrot.slane %v580, 4
        %v582 = vrot.slane %v415, 5
        %v583 = vsel %vm559, %v581, %v582
        %v584 = vrot.slane %v539, 5
        %v585 = vrot.slane %v584, 4
        %v586 = vrot.slane %v416, 5
        %v587 = vsel %vm559, %v585, %v586
        %v588 = vrot.slane %v540, 5
        %v589 = vrot.slane %v588, 4
        %v590 = vrot.slane %v417, 5
        %v591 = vsel %vm559, %v589, %v590
        %v592 = vld [vmem:[%s350] sm:$0xf]
        %v593 = vld [vmem:[%s350 + $0x8] sm:$0xf]
        %v594 = vld [vmem:[%s350 + $0x10] sm:$0xf]
        %v595 = vld [vmem:[%s350 + $0x18] sm:$0xf]
        %v596 = vld [vmem:[%s350 + $0x20] sm:$0xf]
        %v597 = vld [vmem:[%s350 + $0x28] sm:$0xf]
        %v598 = vld [vmem:[%s350 + $0x30] sm:$0xf]
        %v599 = vld [vmem:[%s350 + $0x38] sm:$0xf]
        %v600 = vld [vmem:[%s350 + $0x4] sm:$0x1]
        %v601 = vld [vmem:[%s350 + $0xc] sm:$0x1]
        %v602 = vld [vmem:[%s350 + $0x14] sm:$0x1]
        %v603 = vld [vmem:[%s350 + $0x1c] sm:$0x1]
        %v604 = vld [vmem:[%s350 + $0x24] sm:$0x1]
        %v605 = vld [vmem:[%s350 + $0x2c] sm:$0x1]
        %v606 = vld [vmem:[%s350 + $0x34] sm:$0x1]
        %v607 = vld [vmem:[%s350 + $0x3c] sm:$0x1]
        %v609 = vshrl.u32 %v592, 16
        %v611 = vrot.slane %v609, 4
        %v612 = vshll.u32 %v592, 16
        %v614 = vrot.slane %v612, 5
        %v615 = vor.u32 %v611, %v614
        %v616 = vrot.slane %v615, 4
        %v618 = vshll.u32 %v600, 16
        %v620 = vrot.slane %v618, 5
        %v621 = vsel %vm420, %v616, %v620
        %v623 = vshrl.u32 %v593, 16
        %v625 = vrot.slane %v623, 4
        %v626 = vshll.u32 %v593, 16
        %v628 = vrot.slane %v626, 5
        %v629 = vor.u32 %v625, %v628
        %v630 = vrot.slane %v629, 4
        %v632 = vshll.u32 %v601, 16
        %v634 = vrot.slane %v632, 5
        %v635 = vsel %vm420, %v630, %v634
        %v637 = vshrl.u32 %v594, 16
        %v639 = vrot.slane %v637, 4
        %v640 = vshll.u32 %v594, 16
        %v642 = vrot.slane %v640, 5
        %v643 = vor.u32 %v639, %v642
        %v644 = vrot.slane %v643, 4
        %v646 = vshll.u32 %v602, 16
        %v648 = vrot.slane %v646, 5
        %v649 = vsel %vm420, %v644, %v648
        %v651 = vshrl.u32 %v595, 16
        %v653 = vrot.slane %v651, 4
        %v654 = vshll.u32 %v595, 16
        %v656 = vrot.slane %v654, 5
        %v657 = vor.u32 %v653, %v656
        %v658 = vrot.slane %v657, 4
        %v660 = vshll.u32 %v603, 16
        %v662 = vrot.slane %v660, 5
        %v663 = vsel %vm420, %v658, %v662
        %v665 = vshrl.u32 %v596, 16
        %v667 = vrot.slane %v665, 4
        %v668 = vshll.u32 %v596, 16
        %v670 = vrot.slane %v668, 5
        %v671 = vor.u32 %v667, %v670
        %v672 = vrot.slane %v671, 4
        %v674 = vshll.u32 %v604, 16
        %v676 = vrot.slane %v674, 5
        %v677 = vsel %vm420, %v672, %v676
        %v679 = vshrl.u32 %v597, 16
        %v681 = vrot.slane %v679, 4
        %v682 = vshll.u32 %v597, 16
        %v684 = vrot.slane %v682, 5
        %v685 = vor.u32 %v681, %v684
        %v686 = vrot.slane %v685, 4
        %v688 = vshll.u32 %v605, 16
        %v690 = vrot.slane %v688, 5
        %v691 = vsel %vm420, %v686, %v690
        %v693 = vshrl.u32 %v598, 16
        %v695 = vrot.slane %v693, 4
        %v696 = vshll.u32 %v598, 16
        %v698 = vrot.slane %v696, 5
        %v699 = vor.u32 %v695, %v698
        %v700 = vrot.slane %v699, 4
        %v702 = vshll.u32 %v606, 16
        %v704 = vrot.slane %v702, 5
        %v705 = vsel %vm420, %v700, %v704
        %v707 = vshrl.u32 %v599, 16
        %v709 = vrot.slane %v707, 4
        %v710 = vshll.u32 %v599, 16
        %v712 = vrot.slane %v710, 5
        %v713 = vor.u32 %v709, %v712
        %v714 = vrot.slane %v713, 4
        %v716 = vshll.u32 %v607, 16
        %v718 = vrot.slane %v716, 5
        %v719 = vsel %vm420, %v714, %v718
        %v720 = vld [vmem:[%s350] sm:$0xe]
        %v721 = vld [vmem:[%s350 + $0x8] sm:$0xe]
        %v722 = vld [vmem:[%s350 + $0x10] sm:$0xe]
        %v723 = vld [vmem:[%s350 + $0x18] sm:$0xe]
        %v724 = vld [vmem:[%s350 + $0x20] sm:$0xe]
        %v725 = vld [vmem:[%s350 + $0x28] sm:$0xe]
        %v726 = vld [vmem:[%s350 + $0x30] sm:$0xe]
        %v727 = vld [vmem:[%s350 + $0x38] sm:$0xe]
        %v744 = vrot.slane %v720, 5
        %v745 = vrot.slane %v744, 4
        %v746 = vrot.slane %v600, 5
        %v747 = vsel %vm559, %v745, %v746
        %v748 = vrot.slane %v721, 5
        %v749 = vrot.slane %v748, 4
        %v750 = vrot.slane %v601, 5
        %v751 = vsel %vm559, %v749, %v750
        %v752 = vrot.slane %v722, 5
        %v753 = vrot.slane %v752, 4
        %v754 = vrot.slane %v602, 5
        %v755 = vsel %vm559, %v753, %v754
        %v756 = vrot.slane %v723, 5
        %v757 = vrot.slane %v756, 4
        %v758 = vrot.slane %v603, 5
        %v759 = vsel %vm559, %v757, %v758
        %v760 = vrot.slane %v724, 5
        %v761 = vrot.slane %v760, 4
        %v762 = vrot.slane %v604, 5
        %v763 = vsel %vm559, %v761, %v762
        %v764 = vrot.slane %v725, 5
        %v765 = vrot.slane %v764, 4
        %v766 = vrot.slane %v605, 5
        %v767 = vsel %vm559, %v765, %v766
        %v768 = vrot.slane %v726, 5
        %v769 = vrot.slane %v768, 4
        %v770 = vrot.slane %v606, 5
        %v771 = vsel %vm559, %v769, %v770
        %v772 = vrot.slane %v727, 5
        %v773 = vrot.slane %v772, 4
        %v774 = vrot.slane %v607, 5
        %v775 = vsel %vm559, %v773, %v774
        %s776 = scalar_lea.vmem [#allocation2], 16
        %v777 = vld [vmem:[%s776] sm:$0xf]
        %v778 = vld [vmem:[%s776 + $0x8] sm:$0xf]
        %v779 = vld [vmem:[%s776 + $0x10] sm:$0xf]
        %v780 = vld [vmem:[%s776 + $0x18] sm:$0xf]
        %v781 = vld [vmem:[%s776 + $0x20] sm:$0xf]
        %v782 = vld [vmem:[%s776 + $0x28] sm:$0xf]
        %v783 = vld [vmem:[%s776 + $0x30] sm:$0xf]
        %v784 = vld [vmem:[%s776 + $0x38] sm:$0xf]
        %v785 = vld [vmem:[%s776 + $0x4] sm:$0x1]
        %v786 = vld [vmem:[%s776 + $0xc] sm:$0x1]
        %v787 = vld [vmem:[%s776 + $0x14] sm:$0x1]
        %v788 = vld [vmem:[%s776 + $0x1c] sm:$0x1]
        %v789 = vld [vmem:[%s776 + $0x24] sm:$0x1]
        %v790 = vld [vmem:[%s776 + $0x2c] sm:$0x1]
        %v791 = vld [vmem:[%s776 + $0x34] sm:$0x1]
        %v792 = vld [vmem:[%s776 + $0x3c] sm:$0x1]
        %v794 = vshrl.u32 %v777, 16
        %v796 = vrot.slane %v794, 4
        %v797 = vshll.u32 %v777, 16
        %v799 = vrot.slane %v797, 5
        %v800 = vor.u32 %v796, %v799
        %v801 = vrot.slane %v800, 4
        %v803 = vshll.u32 %v785, 16
        %v805 = vrot.slane %v803, 5
        %v806 = vsel %vm420, %v801, %v805
        %v808 = vshrl.u32 %v778, 16
        %v810 = vrot.slane %v808, 4
        %v811 = vshll.u32 %v778, 16
        %v813 = vrot.slane %v811, 5
        %v814 = vor.u32 %v810, %v813
        %v815 = vrot.slane %v814, 4
        %v817 = vshll.u32 %v786, 16
        %v819 = vrot.slane %v817, 5
        %v820 = vsel %vm420, %v815, %v819
        %v822 = vshrl.u32 %v779, 16
        %v824 = vrot.slane %v822, 4
        %v825 = vshll.u32 %v779, 16
        %v827 = vrot.slane %v825, 5
        %v828 = vor.u32 %v824, %v827
        %v829 = vrot.slane %v828, 4
        %v831 = vshll.u32 %v787, 16
        %v833 = vrot.slane %v831, 5
        %v834 = vsel %vm420, %v829, %v833
        %v836 = vshrl.u32 %v780, 16
        %v838 = vrot.slane %v836, 4
        %v839 = vshll.u32 %v780, 16
        %v841 = vrot.slane %v839, 5
        %v842 = vor.u32 %v838, %v841
        %v843 = vrot.slane %v842, 4
        %v845 = vshll.u32 %v788, 16
        %v847 = vrot.slane %v845, 5
        %v848 = vsel %vm420, %v843, %v847
        %v850 = vshrl.u32 %v781, 16
        %v852 = vrot.slane %v850, 4
        %v853 = vshll.u32 %v781, 16
        %v855 = vrot.slane %v853, 5
        %v856 = vor.u32 %v852, %v855
        %v857 = vrot.slane %v856, 4
        %v859 = vshll.u32 %v789, 16
        %v861 = vrot.slane %v859, 5
        %v862 = vsel %vm420, %v857, %v861
        %v864 = vshrl.u32 %v782, 16
        %v866 = vrot.slane %v864, 4
        %v867 = vshll.u32 %v782, 16
        %v869 = vrot.slane %v867, 5
        %v870 = vor.u32 %v866, %v869
        %v871 = vrot.slane %v870, 4
        %v873 = vshll.u32 %v790, 16
        %v875 = vrot.slane %v873, 5
        %v876 = vsel %vm420, %v871, %v875
        %v878 = vshrl.u32 %v783, 16
        %v880 = vrot.slane %v878, 4
        %v881 = vshll.u32 %v783, 16
        %v883 = vrot.slane %v881, 5
        %v884 = vor.u32 %v880, %v883
        %v885 = vrot.slane %v884, 4
        %v887 = vshll.u32 %v791, 16
        %v889 = vrot.slane %v887, 5
        %v890 = vsel %vm420, %v885, %v889
        %v892 = vshrl.u32 %v784, 16
        %v894 = vrot.slane %v892, 4
        %v895 = vshll.u32 %v784, 16
        %v897 = vrot.slane %v895, 5
        %v898 = vor.u32 %v894, %v897
        %v899 = vrot.slane %v898, 4
        %v901 = vshll.u32 %v792, 16
        %v903 = vrot.slane %v901, 5
        %v904 = vsel %vm420, %v899, %v903
        %v905 = vld [vmem:[%s776] sm:$0xe]
        %v906 = vld [vmem:[%s776 + $0x8] sm:$0xe]
        %v907 = vld [vmem:[%s776 + $0x10] sm:$0xe]
        %v908 = vld [vmem:[%s776 + $0x18] sm:$0xe]
        %v909 = vld [vmem:[%s776 + $0x20] sm:$0xe]
        %v910 = vld [vmem:[%s776 + $0x28] sm:$0xe]
        %v911 = vld [vmem:[%s776 + $0x30] sm:$0xe]
        %v912 = vld [vmem:[%s776 + $0x38] sm:$0xe]
        %v929 = vrot.slane %v905, 5
        %v930 = vrot.slane %v929, 4
        %v931 = vrot.slane %v785, 5
        %v932 = vsel %vm559, %v930, %v931
        %v933 = vrot.slane %v906, 5
        %v934 = vrot.slane %v933, 4
        %v935 = vrot.slane %v786, 5
        %v936 = vsel %vm559, %v934, %v935
        %v937 = vrot.slane %v907, 5
        %v938 = vrot.slane %v937, 4
        %v939 = vrot.slane %v787, 5
        %v940 = vsel %vm559, %v938, %v939
        %v941 = vrot.slane %v908, 5
        %v942 = vrot.slane %v941, 4
        %v943 = vrot.slane %v788, 5
        %v944 = vsel %vm559, %v942, %v943
        %v945 = vrot.slane %v909, 5
        %v946 = vrot.slane %v945, 4
        %v947 = vrot.slane %v789, 5
        %v948 = vsel %vm559, %v946, %v947
        %v949 = vrot.slane %v910, 5
        %v950 = vrot.slane %v949, 4
        %v951 = vrot.slane %v790, 5
        %v952 = vsel %vm559, %v950, %v951
        %v953 = vrot.slane %v911, 5
        %v954 = vrot.slane %v953, 4
        %v955 = vrot.slane %v791, 5
        %v956 = vsel %vm559, %v954, %v955
        %v957 = vrot.slane %v912, 5
        %v958 = vrot.slane %v957, 4
        %v959 = vrot.slane %v792, 5
        %v960 = vsel %vm559, %v958, %v959
        %v961 = vunpack.c.l.b16 %v621
        %v962 = vunpack.c.l.b16 %v635
        %v963 = vunpack.c.l.b16 %v649
        %v964 = vunpack.c.l.b16 %v663
        %v965 = vunpack.c.l.b16 %v677
        %v966 = vunpack.c.l.b16 %v691
        %v967 = vunpack.c.l.b16 %v705
        %v968 = vunpack.c.l.b16 %v719
        %v969 = vpack.c.b16 %v962, %v961
        %v970 = vpack.c.b16 %v964, %v963
        %v971 = vpack.c.b16 %v966, %v965
        %v972 = vpack.c.b16 %v968, %v967
        %v981 = vunpack.c.l.b16 %v592
        %v982 = vunpack.c.l.b16 %v593
        %v983 = vunpack.c.l.b16 %v594
        %v984 = vunpack.c.l.b16 %v595
        %v985 = vunpack.c.l.b16 %v596
        %v986 = vunpack.c.l.b16 %v597
        %v987 = vunpack.c.l.b16 %v598
        %v988 = vunpack.c.l.b16 %v599
        %v989 = vpack.c.b16 %v982, %v981
        %v990 = vpack.c.b16 %v984, %v983
        %v991 = vpack.c.b16 %v986, %v985
        %v992 = vpack.c.b16 %v988, %v987
        %993 = vrot.lane.b32.xlu0 %v989, 8
        %v994 = vpop.permute.xlu0 %993
        %995 = vrot.lane.b32.xlu0 %v990, 8
        %v996 = vpop.permute.xlu0 %995
        %997 = vrot.lane.b32.xlu0 %v991, 8
        %v998 = vpop.permute.xlu0 %997
        %999 = vrot.lane.b32.xlu0 %v992, 8
        %v1000 = vpop.permute.xlu0 %999
        %v1001 = vunpack.c.l.b16 %v434
        %v1002 = vunpack.c.l.b16 %v448
        %v1003 = vunpack.c.l.b16 %v462
        %v1004 = vunpack.c.l.b16 %v476
        %v1005 = vunpack.c.l.b16 %v490
        %v1006 = vunpack.c.l.b16 %v504
        %v1007 = vunpack.c.l.b16 %v518
        %v1008 = vunpack.c.l.b16 %v532
        %v1009 = vpack.c.b16 %v1002, %v1001
        %v1010 = vpack.c.b16 %v1004, %v1003
        %v1011 = vpack.c.b16 %v1006, %v1005
        %v1012 = vpack.c.b16 %v1008, %v1007
        %1013 = vrot.lane.b32.xlu0 %v1009, 16
        %v1014 = vpop.permute.xlu0 %1013
        %1015 = vrot.lane.b32.xlu0 %v1010, 16
        %v1016 = vpop.permute.xlu0 %1015
        %1017 = vrot.lane.b32.xlu0 %v1011, 16
        %v1018 = vpop.permute.xlu0 %1017
        %1019 = vrot.lane.b32.xlu0 %v1012, 16
        %v1020 = vpop.permute.xlu0 %1019
        %v1029 = vunpack.c.l.b16 %v402
        %v1030 = vunpack.c.l.b16 %v403
        %v1031 = vunpack.c.l.b16 %v404
        %v1032 = vunpack.c.l.b16 %v405
        %v1033 = vunpack.c.l.b16 %v406
        %v1034 = vunpack.c.l.b16 %v407
        %v1035 = vunpack.c.l.b16 %v408
        %v1036 = vunpack.c.l.b16 %v409
        %v1037 = vpack.c.b16 %v1030, %v1029
        %v1038 = vpack.c.b16 %v1032, %v1031
        %v1039 = vpack.c.b16 %v1034, %v1033
        %v1040 = vpack.c.b16 %v1036, %v1035
        %1041 = vrot.lane.b32.xlu0 %v1037, 24
        %v1042 = vpop.permute.xlu0 %1041
        %1043 = vrot.lane.b32.xlu0 %v1038, 24
        %v1044 = vpop.permute.xlu0 %1043
        %1045 = vrot.lane.b32.xlu0 %v1039, 24
        %v1046 = vpop.permute.xlu0 %1045
        %1047 = vrot.lane.b32.xlu0 %v1040, 24
        %v1048 = vpop.permute.xlu0 %1047
        %vm1049 = vcmask 64512
        %v1052 = vsel %vm1049, %v969, %v994
        %v1055 = vsel %vm1049, %v970, %v996
        %v1058 = vsel %vm1049, %v971, %v998
        %v1061 = vsel %vm1049, %v972, %v1000
        %vm1062 = vcmask 130048
        %v1064 = vsel %vm1062, %v1052, %v1014
        %v1066 = vsel %vm1062, %v1055, %v1016
        %v1068 = vsel %vm1062, %v1058, %v1018
        %v1070 = vsel %vm1062, %v1061, %v1020
        %vm1071 = vcmask 195584
        %v1073 = vsel %vm1071, %v1064, %v1042
        %v1075 = vsel %vm1071, %v1066, %v1044
        %v1077 = vsel %vm1071, %v1068, %v1046
        %v1079 = vsel %vm1071, %v1070, %v1048
        %v1080 = vld [vmem:[%s1] sm:$0xf]
        %v1081 = vld [vmem:[%s1 + $0x4] sm:$0xf]
        %v1082 = vld [vmem:[%s1 + $0x8] sm:$0xf]
        %v1083 = vld [vmem:[%s1 + $0xc] sm:$0xf]
        %v1085 = vlaneseq
        %v1086 = vshrl.u32 %v1085, 7
        %v1087 = vsub.s32 0, %v1086
        %v1088 = vrot.slane %v401, %v1087
        %v1094 = vunpack.c.l.b16 %v1080
        %v1095 = vunpack.c.l.b16 %v1081
        %v1096 = vunpack.c.l.b16 %v1082
        %v1097 = vunpack.c.l.b16 %v1083
        %v1098 = vpack.c.b16 %v1095, %v1094
        %v1099 = vpack.c.b16 %v1097, %v1096
        %vm1102 = vcmask 261120
        %v1103 = vsel %vm1102, %v1073, 0
        %v1105 = vsel %vm1102, %v1075, 0
        %v1107 = vsel %vm1102, %v1077, 0
        %v1109 = vsel %vm1102, %v1079, 0
        %1111 = vmatprep.subr.bf16.mxu0 0
        %1112 = vmatpush1.bf16.msra.mxu0 %v1098
        %1113 = vmatprep.subr.bf16.mxu0 0
        %1114 = vmatpush1.bf16.msra.mxu0 %v1099
        %1115 = vmatprep.subr.bf16.mxu0 0
        %1116 = vmatpush1.bf16.msra.mxu0 0
        %1117 = vmatprep.subr.bf16.mxu0 0
        %1118 = vmatpush1.bf16.msra.mxu0 0
        %1119 = vmatprep.subr.bf16.mxu0 0
        %1120 = vmatpush1.bf16.msra.mxu0 0
        %1121 = vmatprep.subr.bf16.mxu0 0
        %1122 = vmatpush1.bf16.msra.mxu0 0
        %1123 = vmatprep.subr.bf16.mxu0 0
        %1124 = vmatpush1.bf16.msra.mxu0 0
        %1125 = vmatprep.subr.bf16.mxu0 0
        %1126 = vmatpush1.bf16.msra.mxu0 0
        %1127 = vmatprep.subr.bf16.mxu0 0
        %1128 = vmatpush1.bf16.msra.mxu0 0
        %1129 = vmatprep.subr.bf16.mxu0 0
        %1130 = vmatpush1.bf16.msra.mxu0 0
        %1131 = vmatprep.subr.bf16.mxu0 0
        %1132 = vmatpush1.bf16.msra.mxu0 0
        %1133 = vmatprep.subr.bf16.mxu0 0
        %1134 = vmatpush1.bf16.msra.mxu0 0
        %1135 = vmatprep.subr.bf16.mxu0 0
        %1136 = vmatpush1.bf16.msra.mxu0 0
        %1137 = vmatprep.subr.bf16.mxu0 0
        %1138 = vmatpush1.bf16.msra.mxu0 0
        %1139 = vmatprep.subr.bf16.mxu0 0
        %1140 = vmatpush1.bf16.msra.mxu0 0
        %1141 = vmatprep.subr.bf16.mxu0 0
        %1142 = vmatpush1.bf16.msra.mxu0 0
        %1143 = vmatprep.mubr.bf16.mxu0 0
        %1144 = vmatmul.mubr.bf16.gmra.mrb[0].mxu0 %v1103
        %v1145 = vpop.f32.mrb[0].mxu0
        %v1146 = vadd.f32 %v1088, %v1145
        %v1147 = vpop.f32.mrb[0].mxu0
        %v1148 = vpop.f32.mrb[0].mxu0
        %v1149 = vadd.f32 %v1088, %v1148
        %v1150 = vpop.f32.mrb[0].mxu0
        %1151 = vmatprep.mubr.bf16.mxu0 0
        %1152 = vmatmul.mubr.bf16.gmra.mrb[0].mxu0 %v1105
        %v1153 = vpop.f32.mrb[0].mxu0
        %v1154 = vadd.f32 %v1088, %v1153
        %v1155 = vpop.f32.mrb[0].mxu0
        %v1156 = vpop.f32.mrb[0].mxu0
        %v1157 = vadd.f32 %v1088, %v1156
        %v1158 = vpop.f32.mrb[0].mxu0
        %1159 = vmatprep.mubr.bf16.mxu0 0
        %1160 = vmatmul.mubr.bf16.gmra.mrb[0].mxu0 %v1107
        %v1161 = vpop.f32.mrb[0].mxu0
        %v1162 = vadd.f32 %v1088, %v1161
        %v1163 = vpop.f32.mrb[0].mxu0
        %v1164 = vpop.f32.mrb[0].mxu0
        %v1165 = vadd.f32 %v1088, %v1164
        %v1166 = vpop.f32.mrb[0].mxu0
        %1167 = vmatprep.mubr.bf16.mxu0 0
        %1168 = vmatmul.mubr.bf16.gmra.mrb[0].mxu0 %v1109
        %v1169 = vpop.f32.mrb[0].mxu0
        %v1170 = vadd.f32 %v1088, %v1169
        %v1171 = vpop.f32.mrb[0].mxu0
        %v1172 = vpop.f32.mrb[0].mxu0
        %v1173 = vadd.f32 %v1088, %v1172
        %v1174 = vpop.f32.mrb[0].mxu0
        %1175 = vdwg.mxu0
        %v1176 = vsub.f32 0.0, %v1146
        %v1177 = vsub.f32 0.0, %v1149
        %v1178 = vsub.f32 0.0, %v1154
        %v1179 = vsub.f32 0.0, %v1157
        %v1180 = vsub.f32 0.0, %v1162
        %v1181 = vsub.f32 0.0, %v1165
        %v1182 = vsub.f32 0.0, %v1170
        %v1183 = vsub.f32 0.0, %v1173
        %v1184 = vmul.f32 %v1176, 1.442695
        %v1185 = vpow.pop %v1184
        %v1186 = vmul.f32 %v1177, 1.442695
        %v1187 = vpow.pop %v1186
        %v1188 = vmul.f32 %v1178, 1.442695
        %v1189 = vpow.pop %v1188
        %v1190 = vmul.f32 %v1179, 1.442695
        %v1191 = vpow.pop %v1190
        %v1192 = vmul.f32 %v1180, 1.442695
        %v1193 = vpow.pop %v1192
        %v1194 = vmul.f32 %v1181, 1.442695
        %v1195 = vpow.pop %v1194
        %v1196 = vmul.f32 %v1182, 1.442695
        %v1197 = vpow.pop %v1196
        %v1198 = vmul.f32 %v1183, 1.442695
        %v1199 = vpow.pop %v1198
        %v1200 = vadd.f32 %v1185, 1.0
        %v1201 = vadd.f32 %v1187, 1.0
        %v1202 = vadd.f32 %v1189, 1.0
        %v1203 = vadd.f32 %v1191, 1.0
        %v1204 = vadd.f32 %v1193, 1.0
        %v1205 = vadd.f32 %v1195, 1.0
        %v1206 = vadd.f32 %v1197, 1.0
        %v1207 = vadd.f32 %v1199, 1.0
        %v1208 = vrcp.pop %v1200
        %v1209 = vrcp.pop %v1201
        %v1210 = vrcp.pop %v1202
        %v1211 = vrcp.pop %v1203
        %v1212 = vrcp.pop %v1204
        %v1213 = vrcp.pop %v1205
        %v1214 = vrcp.pop %v1206
        %v1215 = vrcp.pop %v1207
        %v1216 = vmul.f32 %v1146, %v1208
        %v1217 = vmul.f32 %v1149, %v1209
        %v1218 = vmul.f32 %v1154, %v1210
        %v1219 = vmul.f32 %v1157, %v1211
        %v1220 = vmul.f32 %v1162, %v1212
        %v1221 = vmul.f32 %v1165, %v1213
        %v1222 = vmul.f32 %v1170, %v1214
        %v1223 = vmul.f32 %v1173, %v1215
        %v1224 = vunpack.c.l.b16 %v747
        %v1225 = vunpack.c.l.b16 %v751
        %v1226 = vunpack.c.l.b16 %v755
        %v1227 = vunpack.c.l.b16 %v759
        %v1228 = vunpack.c.l.b16 %v763
        %v1229 = vunpack.c.l.b16 %v767
        %v1230 = vunpack.c.l.b16 %v771
        %v1231 = vunpack.c.l.b16 %v775
        %v1232 = vpack.c.b16 %v1225, %v1224
        %v1233 = vpack.c.b16 %v1227, %v1226
        %v1234 = vpack.c.b16 %v1229, %v1228
        %v1235 = vpack.c.b16 %v1231, %v1230
        %1236 = vrot.lane.b32.xlu0 %v969, 8
        %v1237 = vpop.permute.xlu0 %1236
        %1238 = vrot.lane.b32.xlu0 %v970, 8
        %v1239 = vpop.permute.xlu0 %1238
        %1240 = vrot.lane.b32.xlu0 %v971, 8
        %v1241 = vpop.permute.xlu0 %1240
        %1242 = vrot.lane.b32.xlu0 %v972, 8
        %v1243 = vpop.permute.xlu0 %1242
        %v1244 = vunpack.c.l.b16 %v563
        %v1245 = vunpack.c.l.b16 %v567
        %v1246 = vunpack.c.l.b16 %v571
        %v1247 = vunpack.c.l.b16 %v575
        %v1248 = vunpack.c.l.b16 %v579
        %v1249 = vunpack.c.l.b16 %v583
        %v1250 = vunpack.c.l.b16 %v587
        %v1251 = vunpack.c.l.b16 %v591
        %v1252 = vpack.c.b16 %v1245, %v1244
        %v1253 = vpack.c.b16 %v1247, %v1246
        %v1254 = vpack.c.b16 %v1249, %v1248
        %v1255 = vpack.c.b16 %v1251, %v1250
        %1256 = vrot.lane.b32.xlu0 %v1252, 16
        %v1257 = vpop.permute.xlu0 %1256
        %1258 = vrot.lane.b32.xlu0 %v1253, 16
        %v1259 = vpop.permute.xlu0 %1258
        %1260 = vrot.lane.b32.xlu0 %v1254, 16
        %v1261 = vpop.permute.xlu0 %1260
        %1262 = vrot.lane.b32.xlu0 %v1255, 16
        %v1263 = vpop.permute.xlu0 %1262
        %1264 = vrot.lane.b32.xlu0 %v1009, 24
        %v1265 = vpop.permute.xlu0 %1264
        %1266 = vrot.lane.b32.xlu0 %v1010, 24
        %v1267 = vpop.permute.xlu0 %1266
        %1268 = vrot.lane.b32.xlu0 %v1011, 24
        %v1269 = vpop.permute.xlu0 %1268
        %1270 = vrot.lane.b32.xlu0 %v1012, 24
        %v1271 = vpop.permute.xlu0 %1270
        %v1274 = vsel %vm1049, %v1232, %v1237
        %v1277 = vsel %vm1049, %v1233, %v1239
        %v1280 = vsel %vm1049, %v1234, %v1241
        %v1283 = vsel %vm1049, %v1235, %v1243
        %v1285 = vsel %vm1062, %v1274, %v1257
        %v1287 = vsel %vm1062, %v1277, %v1259
        %v1289 = vsel %vm1062, %v1280, %v1261
        %v1291 = vsel %vm1062, %v1283, %v1263
        %v1293 = vsel %vm1071, %v1285, %v1265
        %v1295 = vsel %vm1071, %v1287, %v1267
        %v1297 = vsel %vm1071, %v1289, %v1269
        %v1299 = vsel %vm1071, %v1291, %v1271
        %s1300 = scalar_lea.vmem %s1, 16
        %v1301 = vld [vmem:[%s1300] sm:$0xf]
        %v1302 = vld [vmem:[%s1300 + $0x4] sm:$0xf]
        %v1303 = vld [vmem:[%s1300 + $0x8] sm:$0xf]
        %v1304 = vld [vmem:[%s1300 + $0xc] sm:$0xf]
        %v1309 = vunpack.c.l.b16 %v1301
        %v1310 = vunpack.c.l.b16 %v1302
        %v1311 = vunpack.c.l.b16 %v1303
        %v1312 = vunpack.c.l.b16 %v1304
        %v1313 = vpack.c.b16 %v1310, %v1309
        %v1314 = vpack.c.b16 %v1312, %v1311
        %v1317 = vsel %vm1102, %v1293, 0
        %v1319 = vsel %vm1102, %v1295, 0
        %v1321 = vsel %vm1102, %v1297, 0
        %v1323 = vsel %vm1102, %v1299, 0
        %1325 = vmatprep.subr.bf16.mxu0 0
        %1326 = vmatpush1.bf16.msra.mxu0 %v1313
        %1327 = vmatprep.subr.bf16.mxu0 0
        %1328 = vmatpush1.bf16.msra.mxu0 %v1314
        %1329 = vmatprep.subr.bf16.mxu0 0
        %1330 = vmatpush1.bf16.msra.mxu0 0
        %1331 = vmatprep.subr.bf16.mxu0 0
        %1332 = vmatpush1.bf16.msra.mxu0 0
        %1333 = vmatprep.subr.bf16.mxu0 0
        %1334 = vmatpush1.bf16.msra.mxu0 0
        %1335 = vmatprep.subr.bf16.mxu0 0
        %1336 = vmatpush1.bf16.msra.mxu0 0
        %1337 = vmatprep.subr.bf16.mxu0 0
        %1338 = vmatpush1.bf16.msra.mxu0 0
        %1339 = vmatprep.subr.bf16.mxu0 0
        %1340 = vmatpush1.bf16.msra.mxu0 0
        %1341 = vmatprep.subr.bf16.mxu0 0
        %1342 = vmatpush1.bf16.msra.mxu0 0
        %1343 = vmatprep.subr.bf16.mxu0 0
        %1344 = vmatpush1.bf16.msra.mxu0 0
        %1345 = vmatprep.subr.bf16.mxu0 0
        %1346 = vmatpush1.bf16.msra.mxu0 0
        %1347 = vmatprep.subr.bf16.mxu0 0
        %1348 = vmatpush1.bf16.msra.mxu0 0
        %1349 = vmatprep.subr.bf16.mxu0 0
        %1350 = vmatpush1.bf16.msra.mxu0 0
        %1351 = vmatprep.subr.bf16.mxu0 0
        %1352 = vmatpush1.bf16.msra.mxu0 0
        %1353 = vmatprep.subr.bf16.mxu0 0
        %1354 = vmatpush1.bf16.msra.mxu0 0
        %1355 = vmatprep.subr.bf16.mxu0 0
        %1356 = vmatpush1.bf16.msra.mxu0 0
        %1357 = vmatprep.mubr.bf16.mxu0 0
        %1358 = vmatmul.mubr.bf16.gmra.mrb[0].mxu0 %v1317
        %v1359 = vpop.f32.mrb[0].mxu0
        %v1360 = vadd.f32 %v1088, %v1359
        %v1361 = vpop.f32.mrb[0].mxu0
        %v1362 = vpop.f32.mrb[0].mxu0
        %v1363 = vadd.f32 %v1088, %v1362
        %v1364 = vpop.f32.mrb[0].mxu0
        %1365 = vmatprep.mubr.bf16.mxu0 0
        %1366 = vmatmul.mubr.bf16.gmra.mrb[0].mxu0 %v1319
        %v1367 = vpop.f32.mrb[0].mxu0
        %v1368 = vadd.f32 %v1088, %v1367
        %v1369 = vpop.f32.mrb[0].mxu0
        %v1370 = vpop.f32.mrb[0].mxu0
        %v1371 = vadd.f32 %v1088, %v1370
        %v1372 = vpop.f32.mrb[0].mxu0
        %1373 = vmatprep.mubr.bf16.mxu0 0
        %1374 = vmatmul.mubr.bf16.gmra.mrb[0].mxu0 %v1321
        %v1375 = vpop.f32.mrb[0].mxu0
        %v1376 = vadd.f32 %v1088, %v1375
        %v1377 = vpop.f32.mrb[0].mxu0
        %v1378 = vpop.f32.mrb[0].mxu0
        %v1379 = vadd.f32 %v1088, %v1378
        %v1380 = vpop.f32.mrb[0].mxu0
        %1381 = vmatprep.mubr.bf16.mxu0 0
        %1382 = vmatmul.mubr.bf16.gmra.mrb[0].mxu0 %v1323
        %v1383 = vpop.f32.mrb[0].mxu0
        %v1384 = vadd.f32 %v1088, %v1383
        %v1385 = vpop.f32.mrb[0].mxu0
        %v1386 = vpop.f32.mrb[0].mxu0
        %v1387 = vadd.f32 %v1088, %v1386
        %v1388 = vpop.f32.mrb[0].mxu0
        %1389 = vdwg.mxu0
        %v1390 = vsub.f32 0.0, %v1360
        %v1391 = vsub.f32 0.0, %v1363
        %v1392 = vsub.f32 0.0, %v1368
        %v1393 = vsub.f32 0.0, %v1371
        %v1394 = vsub.f32 0.0, %v1376
        %v1395 = vsub.f32 0.0, %v1379
        %v1396 = vsub.f32 0.0, %v1384
        %v1397 = vsub.f32 0.0, %v1387
        %v1398 = vmul.f32 %v1390, 1.442695
        %v1399 = vpow.pop %v1398
        %v1400 = vmul.f32 %v1391, 1.442695
        %v1401 = vpow.pop %v1400
        %v1402 = vmul.f32 %v1392, 1.442695
        %v1403 = vpow.pop %v1402
        %v1404 = vmul.f32 %v1393, 1.442695
        %v1405 = vpow.pop %v1404
        %v1406 = vmul.f32 %v1394, 1.442695
        %v1407 = vpow.pop %v1406
        %v1408 = vmul.f32 %v1395, 1.442695
        %v1409 = vpow.pop %v1408
        %v1410 = vmul.f32 %v1396, 1.442695
        %v1411 = vpow.pop %v1410
        %v1412 = vmul.f32 %v1397, 1.442695
        %v1413 = vpow.pop %v1412
        %v1414 = vadd.f32 %v1399, 1.0
        %v1415 = vadd.f32 %v1401, 1.0
        %v1416 = vadd.f32 %v1403, 1.0
        %v1417 = vadd.f32 %v1405, 1.0
        %v1418 = vadd.f32 %v1407, 1.0
        %v1419 = vadd.f32 %v1409, 1.0
        %v1420 = vadd.f32 %v1411, 1.0
        %v1421 = vadd.f32 %v1413, 1.0
        %v1422 = vrcp.pop %v1414
        %v1423 = vrcp.pop %v1415
        %v1424 = vrcp.pop %v1416
        %v1425 = vrcp.pop %v1417
        %v1426 = vrcp.pop %v1418
        %v1427 = vrcp.pop %v1419
        %v1428 = vrcp.pop %v1420
        %v1429 = vrcp.pop %v1421
        %v1430 = vmul.f32 %v1360, %v1422
        %v1431 = vmul.f32 %v1363, %v1423
        %v1432 = vmul.f32 %v1368, %v1424
        %v1433 = vmul.f32 %v1371, %v1425
        %v1434 = vmul.f32 %v1376, %v1426
        %v1435 = vmul.f32 %v1379, %v1427
        %v1436 = vmul.f32 %v1384, %v1428
        %v1437 = vmul.f32 %v1387, %v1429
        %1446 = vrot.lane.b32.xlu0 %v1430, 16
        %v1447 = vpop.permute.xlu0 %1446
        %1448 = vrot.lane.b32.xlu0 %v1431, 16
        %v1449 = vpop.permute.xlu0 %1448
        %1450 = vrot.lane.b32.xlu0 %v1432, 16
        %v1451 = vpop.permute.xlu0 %1450
        %1452 = vrot.lane.b32.xlu0 %v1433, 16
        %v1453 = vpop.permute.xlu0 %1452
        %1454 = vrot.lane.b32.xlu0 %v1434, 16
        %v1455 = vpop.permute.xlu0 %1454
        %1456 = vrot.lane.b32.xlu0 %v1435, 16
        %v1457 = vpop.permute.xlu0 %1456
        %1458 = vrot.lane.b32.xlu0 %v1436, 16
        %v1459 = vpop.permute.xlu0 %1458
        %1460 = vrot.lane.b32.xlu0 %v1437, 16
        %v1461 = vpop.permute.xlu0 %1460
        %v1470 = vsel %vm1062, %v1216, %v1447
        %v1471 = vsel %vm1062, %v1217, %v1449
        %v1472 = vsel %vm1062, %v1218, %v1451
        %v1473 = vsel %vm1062, %v1219, %v1453
        %v1474 = vsel %vm1062, %v1220, %v1455
        %v1475 = vsel %vm1062, %v1221, %v1457
        %v1476 = vsel %vm1062, %v1222, %v1459
        %v1477 = vsel %vm1062, %v1223, %v1461
        %v1478 = vunpack.c.l.b16 %v806
        %v1479 = vunpack.c.l.b16 %v820
        %v1480 = vunpack.c.l.b16 %v834
        %v1481 = vunpack.c.l.b16 %v848
        %v1482 = vunpack.c.l.b16 %v862
        %v1483 = vunpack.c.l.b16 %v876
        %v1484 = vunpack.c.l.b16 %v890
        %v1485 = vunpack.c.l.b16 %v904
        %v1486 = vpack.c.b16 %v1479, %v1478
        %v1487 = vpack.c.b16 %v1481, %v1480
        %v1488 = vpack.c.b16 %v1483, %v1482
        %v1489 = vpack.c.b16 %v1485, %v1484
        %v1498 = vunpack.c.l.b16 %v777
        %v1499 = vunpack.c.l.b16 %v778
        %v1500 = vunpack.c.l.b16 %v779
        %v1501 = vunpack.c.l.b16 %v780
        %v1502 = vunpack.c.l.b16 %v781
        %v1503 = vunpack.c.l.b16 %v782
        %v1504 = vunpack.c.l.b16 %v783
        %v1505 = vunpack.c.l.b16 %v784
        %v1506 = vpack.c.b16 %v1499, %v1498
        %v1507 = vpack.c.b16 %v1501, %v1500
        %v1508 = vpack.c.b16 %v1503, %v1502
        %v1509 = vpack.c.b16 %v1505, %v1504
        %1510 = vrot.lane.b32.xlu0 %v1506, 8
        %v1511 = vpop.permute.xlu0 %1510
        %1512 = vrot.lane.b32.xlu0 %v1507, 8
        %v1513 = vpop.permute.xlu0 %1512
        %1514 = vrot.lane.b32.xlu0 %v1508, 8
        %v1515 = vpop.permute.xlu0 %1514
        %1516 = vrot.lane.b32.xlu0 %v1509, 8
        %v1517 = vpop.permute.xlu0 %1516
        %1518 = vrot.lane.b32.xlu0 %v969, 16
        %v1519 = vpop.permute.xlu0 %1518
        %1520 = vrot.lane.b32.xlu0 %v970, 16
        %v1521 = vpop.permute.xlu0 %1520
        %1522 = vrot.lane.b32.xlu0 %v971, 16
        %v1523 = vpop.permute.xlu0 %1522
        %1524 = vrot.lane.b32.xlu0 %v972, 16
        %v1525 = vpop.permute.xlu0 %1524
        %1526 = vrot.lane.b32.xlu0 %v989, 24
        %v1527 = vpop.permute.xlu0 %1526
        %1528 = vrot.lane.b32.xlu0 %v990, 24
        %v1529 = vpop.permute.xlu0 %1528
        %1530 = vrot.lane.b32.xlu0 %v991, 24
        %v1531 = vpop.permute.xlu0 %1530
        %1532 = vrot.lane.b32.xlu0 %v992, 24
        %v1533 = vpop.permute.xlu0 %1532
        %v1536 = vsel %vm1049, %v1486, %v1511
        %v1539 = vsel %vm1049, %v1487, %v1513
        %v1542 = vsel %vm1049, %v1488, %v1515
        %v1545 = vsel %vm1049, %v1489, %v1517
        %v1547 = vsel %vm1062, %v1536, %v1519
        %v1549 = vsel %vm1062, %v1539, %v1521
        %v1551 = vsel %vm1062, %v1542, %v1523
        %v1553 = vsel %vm1062, %v1545, %v1525
        %v1555 = vsel %vm1071, %v1547, %v1527
        %v1557 = vsel %vm1071, %v1549, %v1529
        %v1559 = vsel %vm1071, %v1551, %v1531
        %v1561 = vsel %vm1071, %v1553, %v1533
        %s1562 = scalar_lea.vmem %s1, 32
        %v1563 = vld [vmem:[%s1562] sm:$0xf]
        %v1564 = vld [vmem:[%s1562 + $0x4] sm:$0xf]
        %v1565 = vld [vmem:[%s1562 + $0x8] sm:$0xf]
        %v1566 = vld [vmem:[%s1562 + $0xc] sm:$0xf]
        %v1571 = vunpack.c.l.b16 %v1563
        %v1572 = vunpack.c.l.b16 %v1564
        %v1573 = vunpack.c.l.b16 %v1565
        %v1574 = vunpack.c.l.b16 %v1566
        %v1575 = vpack.c.b16 %v1572, %v1571
        %v1576 = vpack.c.b16 %v1574, %v1573
        %v1579 = vsel %vm1102, %v1555, 0
        %v1581 = vsel %vm1102, %v1557, 0
        %v1583 = vsel %vm1102, %v1559, 0
        %v1585 = vsel %vm1102, %v1561, 0
        %1587 = vmatprep.subr.bf16.mxu0 0
        %1588 = vmatpush1.bf16.msra.mxu0 %v1575
        %1589 = vmatprep.subr.bf16.mxu0 0
        %1590 = vmatpush1.bf16.msra.mxu0 %v1576
        %1591 = vmatprep.subr.bf16.mxu0 0
        %1592 = vmatpush1.bf16.msra.mxu0 0
        %1593 = vmatprep.subr.bf16.mxu0 0
        %1594 = vmatpush1.bf16.msra.mxu0 0
        %1595 = vmatprep.subr.bf16.mxu0 0
        %1596 = vmatpush1.bf16.msra.mxu0 0
        %1597 = vmatprep.subr.bf16.mxu0 0
        %1598 = vmatpush1.bf16.msra.mxu0 0
        %1599 = vmatprep.subr.bf16.mxu0 0
        %1600 = vmatpush1.bf16.msra.mxu0 0
        %1601 = vmatprep.subr.bf16.mxu0 0
        %1602 = vmatpush1.bf16.msra.mxu0 0
        %1603 = vmatprep.subr.bf16.mxu0 0
        %1604 = vmatpush1.bf16.msra.mxu0 0
        %1605 = vmatprep.subr.bf16.mxu0 0
        %1606 = vmatpush1.bf16.msra.mxu0 0
        %1607 = vmatprep.subr.bf16.mxu0 0
        %1608 = vmatpush1.bf16.msra.mxu0 0
        %1609 = vmatprep.subr.bf16.mxu0 0
        %1610 = vmatpush1.bf16.msra.mxu0 0
        %1611 = vmatprep.subr.bf16.mxu0 0
        %1612 = vmatpush1.bf16.msra.mxu0 0
        %1613 = vmatprep.subr.bf16.mxu0 0
        %1614 = vmatpush1.bf16.msra.mxu0 0
        %1615 = vmatprep.subr.bf16.mxu0 0
        %1616 = vmatpush1.bf16.msra.mxu0 0
        %1617 = vmatprep.subr.bf16.mxu0 0
        %1618 = vmatpush1.bf16.msra.mxu0 0
        %1619 = vmatprep.mubr.bf16.mxu0 0
        %1620 = vmatmul.mubr.bf16.gmra.mrb[0].mxu0 %v1579
        %v1621 = vpop.f32.mrb[0].mxu0
        %v1622 = vadd.f32 %v1088, %v1621
        %v1623 = vpop.f32.mrb[0].mxu0
        %v1624 = vpop.f32.mrb[0].mxu0
        %v1625 = vadd.f32 %v1088, %v1624
        %v1626 = vpop.f32.mrb[0].mxu0
        %1627 = vmatprep.mubr.bf16.mxu0 0
        %1628 = vmatmul.mubr.bf16.gmra.mrb[0].mxu0 %v1581
        %v1629 = vpop.f32.mrb[0].mxu0
        %v1630 = vadd.f32 %v1088, %v1629
        %v1631 = vpop.f32.mrb[0].mxu0
        %v1632 = vpop.f32.mrb[0].mxu0
        %v1633 = vadd.f32 %v1088, %v1632
        %v1634 = vpop.f32.mrb[0].mxu0
        %1635 = vmatprep.mubr.bf16.mxu0 0
        %1636 = vmatmul.mubr.bf16.gmra.mrb[0].mxu0 %v1583
        %v1637 = vpop.f32.mrb[0].mxu0
        %v1638 = vadd.f32 %v1088, %v1637
        %v1639 = vpop.f32.mrb[0].mxu0
        %v1640 = vpop.f32.mrb[0].mxu0
        %v1641 = vadd.f32 %v1088, %v1640
        %v1642 = vpop.f32.mrb[0].mxu0
        %1643 = vmatprep.mubr.bf16.mxu0 0
        %1644 = vmatmul.mubr.bf16.gmra.mrb[0].mxu0 %v1585
        %v1645 = vpop.f32.mrb[0].mxu0
        %v1646 = vadd.f32 %v1088, %v1645
        %v1647 = vpop.f32.mrb[0].mxu0
        %v1648 = vpop.f32.mrb[0].mxu0
        %v1649 = vadd.f32 %v1088, %v1648
        %v1650 = vpop.f32.mrb[0].mxu0
        %1651 = vdwg.mxu0
        %v1652 = vsub.f32 0.0, %v1622
        %v1653 = vsub.f32 0.0, %v1625
        %v1654 = vsub.f32 0.0, %v1630
        %v1655 = vsub.f32 0.0, %v1633
        %v1656 = vsub.f32 0.0, %v1638
        %v1657 = vsub.f32 0.0, %v1641
        %v1658 = vsub.f32 0.0, %v1646
        %v1659 = vsub.f32 0.0, %v1649
        %v1660 = vmul.f32 %v1652, 1.442695
        %v1661 = vpow.pop %v1660
        %v1662 = vmul.f32 %v1653, 1.442695
        %v1663 = vpow.pop %v1662
        %v1664 = vmul.f32 %v1654, 1.442695
        %v1665 = vpow.pop %v1664
        %v1666 = vmul.f32 %v1655, 1.442695
        %v1667 = vpow.pop %v1666
        %v1668 = vmul.f32 %v1656, 1.442695
        %v1669 = vpow.pop %v1668
        %v1670 = vmul.f32 %v1657, 1.442695
        %v1671 = vpow.pop %v1670
        %v1672 = vmul.f32 %v1658, 1.442695
        %v1673 = vpow.pop %v1672
        %v1674 = vmul.f32 %v1659, 1.442695
        %v1675 = vpow.pop %v1674
        %v1676 = vadd.f32 %v1661, 1.0
        %v1677 = vadd.f32 %v1663, 1.0
        %v1678 = vadd.f32 %v1665, 1.0
        %v1679 = vadd.f32 %v1667, 1.0
        %v1680 = vadd.f32 %v1669, 1.0
        %v1681 = vadd.f32 %v1671, 1.0
        %v1682 = vadd.f32 %v1673, 1.0
        %v1683 = vadd.f32 %v1675, 1.0
        %v1684 = vrcp.pop %v1676
        %v1685 = vrcp.pop %v1677
        %v1686 = vrcp.pop %v1678
        %v1687 = vrcp.pop %v1679
        %v1688 = vrcp.pop %v1680
        %v1689 = vrcp.pop %v1681
        %v1690 = vrcp.pop %v1682
        %v1691 = vrcp.pop %v1683
        %v1692 = vmul.f32 %v1622, %v1684
        %v1693 = vmul.f32 %v1625, %v1685
        %v1694 = vmul.f32 %v1630, %v1686
        %v1695 = vmul.f32 %v1633, %v1687
        %v1696 = vmul.f32 %v1638, %v1688
        %v1697 = vmul.f32 %v1641, %v1689
        %v1698 = vmul.f32 %v1646, %v1690
        %v1699 = vmul.f32 %v1649, %v1691
        %v1700 = vunpack.c.l.b16 %v932
        %v1701 = vunpack.c.l.b16 %v936
        %v1702 = vunpack.c.l.b16 %v940
        %v1703 = vunpack.c.l.b16 %v944
        %v1704 = vunpack.c.l.b16 %v948
        %v1705 = vunpack.c.l.b16 %v952
        %v1706 = vunpack.c.l.b16 %v956
        %v1707 = vunpack.c.l.b16 %v960
        %v1708 = vpack.c.b16 %v1701, %v1700
        %v1709 = vpack.c.b16 %v1703, %v1702
        %v1710 = vpack.c.b16 %v1705, %v1704
        %v1711 = vpack.c.b16 %v1707, %v1706
        %1712 = vrot.lane.b32.xlu0 %v1486, 8
        %v1713 = vpop.permute.xlu0 %1712
        %1714 = vrot.lane.b32.xlu0 %v1487, 8
        %v1715 = vpop.permute.xlu0 %1714
        %1716 = vrot.lane.b32.xlu0 %v1488, 8
        %v1717 = vpop.permute.xlu0 %1716
        %1718 = vrot.lane.b32.xlu0 %v1489, 8
        %v1719 = vpop.permute.xlu0 %1718
        %1720 = vrot.lane.b32.xlu0 %v1232, 16
        %v1721 = vpop.permute.xlu0 %1720
        %1722 = vrot.lane.b32.xlu0 %v1233, 16
        %v1723 = vpop.permute.xlu0 %1722
        %1724 = vrot.lane.b32.xlu0 %v1234, 16
        %v1725 = vpop.permute.xlu0 %1724
        %1726 = vrot.lane.b32.xlu0 %v1235, 16
        %v1727 = vpop.permute.xlu0 %1726
        %1728 = vrot.lane.b32.xlu0 %v969, 24
        %v1729 = vpop.permute.xlu0 %1728
        %1730 = vrot.lane.b32.xlu0 %v970, 24
        %v1731 = vpop.permute.xlu0 %1730
        %1732 = vrot.lane.b32.xlu0 %v971, 24
        %v1733 = vpop.permute.xlu0 %1732
        %1734 = vrot.lane.b32.xlu0 %v972, 24
        %v1735 = vpop.permute.xlu0 %1734
        %v1738 = vsel %vm1049, %v1708, %v1713
        %v1741 = vsel %vm1049, %v1709, %v1715
        %v1744 = vsel %vm1049, %v1710, %v1717
        %v1747 = vsel %vm1049, %v1711, %v1719
        %v1749 = vsel %vm1062, %v1738, %v1721
        %v1751 = vsel %vm1062, %v1741, %v1723
        %v1753 = vsel %vm1062, %v1744, %v1725
        %v1755 = vsel %vm1062, %v1747, %v1727
        %v1757 = vsel %vm1071, %v1749, %v1729
        %v1759 = vsel %vm1071, %v1751, %v1731
        %v1761 = vsel %vm1071, %v1753, %v1733
        %v1763 = vsel %vm1071, %v1755, %v1735
        %s1764 = scalar_lea.vmem %s1, 48
        %v1765 = vld [vmem:[%s1764] sm:$0xf]
        %v1766 = vld [vmem:[%s1764 + $0x4] sm:$0xf]
        %v1767 = vld [vmem:[%s1764 + $0x8] sm:$0xf]
        %v1768 = vld [vmem:[%s1764 + $0xc] sm:$0xf]
        %v1773 = vunpack.c.l.b16 %v1765
        %v1774 = vunpack.c.l.b16 %v1766
        %v1775 = vunpack.c.l.b16 %v1767
        %v1776 = vunpack.c.l.b16 %v1768
        %v1777 = vpack.c.b16 %v1774, %v1773
        %v1778 = vpack.c.b16 %v1776, %v1775
        %v1781 = vsel %vm1102, %v1757, 0
        %v1783 = vsel %vm1102, %v1759, 0
        %v1785 = vsel %vm1102, %v1761, 0
        %v1787 = vsel %vm1102, %v1763, 0
        %1789 = vmatprep.subr.bf16.mxu0 0
        %1790 = vmatpush1.bf16.msra.mxu0 %v1777
        %1791 = vmatprep.subr.bf16.mxu0 0
        %1792 = vmatpush1.bf16.msra.mxu0 %v1778
        %1793 = vmatprep.subr.bf16.mxu0 0
        %1794 = vmatpush1.bf16.msra.mxu0 0
        %1795 = vmatprep.subr.bf16.mxu0 0
        %1796 = vmatpush1.bf16.msra.mxu0 0
        %1797 = vmatprep.subr.bf16.mxu0 0
        %1798 = vmatpush1.bf16.msra.mxu0 0
        %1799 = vmatprep.subr.bf16.mxu0 0
        %1800 = vmatpush1.bf16.msra.mxu0 0
        %1801 = vmatprep.subr.bf16.mxu0 0
        %1802 = vmatpush1.bf16.msra.mxu0 0
        %1803 = vmatprep.subr.bf16.mxu0 0
        %1804 = vmatpush1.bf16.msra.mxu0 0
        %1805 = vmatprep.subr.bf16.mxu0 0
        %1806 = vmatpush1.bf16.msra.mxu0 0
        %1807 = vmatprep.subr.bf16.mxu0 0
        %1808 = vmatpush1.bf16.msra.mxu0 0
        %1809 = vmatprep.subr.bf16.mxu0 0
        %1810 = vmatpush1.bf16.msra.mxu0 0
        %1811 = vmatprep.subr.bf16.mxu0 0
        %1812 = vmatpush1.bf16.msra.mxu0 0
        %1813 = vmatprep.subr.bf16.mxu0 0
        %1814 = vmatpush1.bf16.msra.mxu0 0
        %1815 = vmatprep.subr.bf16.mxu0 0
        %1816 = vmatpush1.bf16.msra.mxu0 0
        %1817 = vmatprep.subr.bf16.mxu0 0
        %1818 = vmatpush1.bf16.msra.mxu0 0
        %1819 = vmatprep.subr.bf16.mxu0 0
        %1820 = vmatpush1.bf16.msra.mxu0 0
        %1821 = vmatprep.mubr.bf16.mxu0 0
        %1822 = vmatmul.mubr.bf16.gmra.mrb[0].mxu0 %v1781
        %v1823 = vpop.f32.mrb[0].mxu0
        %v1824 = vadd.f32 %v1088, %v1823
        %v1825 = vpop.f32.mrb[0].mxu0
        %v1826 = vpop.f32.mrb[0].mxu0
        %v1827 = vadd.f32 %v1088, %v1826
        %v1828 = vpop.f32.mrb[0].mxu0
        %1829 = vmatprep.mubr.bf16.mxu0 0
        %1830 = vmatmul.mubr.bf16.gmra.mrb[0].mxu0 %v1783
        %v1831 = vpop.f32.mrb[0].mxu0
        %v1832 = vadd.f32 %v1088, %v1831
        %v1833 = vpop.f32.mrb[0].mxu0
        %v1834 = vpop.f32.mrb[0].mxu0
        %v1835 = vadd.f32 %v1088, %v1834
        %v1836 = vpop.f32.mrb[0].mxu0
        %1837 = vmatprep.mubr.bf16.mxu0 0
        %1838 = vmatmul.mubr.bf16.gmra.mrb[0].mxu0 %v1785
        %v1839 = vpop.f32.mrb[0].mxu0
        %v1840 = vadd.f32 %v1088, %v1839
        %v1841 = vpop.f32.mrb[0].mxu0
        %v1842 = vpop.f32.mrb[0].mxu0
        %v1843 = vadd.f32 %v1088, %v1842
        %v1844 = vpop.f32.mrb[0].mxu0
        %1845 = vmatprep.mubr.bf16.mxu0 0
        %1846 = vmatmul.mubr.bf16.gmra.mrb[0].mxu0 %v1787
        %v1847 = vpop.f32.mrb[0].mxu0
        %v1848 = vadd.f32 %v1088, %v1847
        %v1849 = vpop.f32.mrb[0].mxu0
        %v1850 = vpop.f32.mrb[0].mxu0
        %v1851 = vadd.f32 %v1088, %v1850
        %v1852 = vpop.f32.mrb[0].mxu0
        %1853 = vdwg.mxu0
        %v1854 = vsub.f32 0.0, %v1824
        %v1855 = vsub.f32 0.0, %v1827
        %v1856 = vsub.f32 0.0, %v1832
        %v1857 = vsub.f32 0.0, %v1835
        %v1858 = vsub.f32 0.0, %v1840
        %v1859 = vsub.f32 0.0, %v1843
        %v1860 = vsub.f32 0.0, %v1848
        %v1861 = vsub.f32 0.0, %v1851
        %v1862 = vmul.f32 %v1854, 1.442695
        %v1863 = vpow.pop %v1862
        %v1864 = vmul.f32 %v1855, 1.442695
        %v1865 = vpow.pop %v1864
        %v1866 = vmul.f32 %v1856, 1.442695
        %v1867 = vpow.pop %v1866
        %v1868 = vmul.f32 %v1857, 1.442695
        %v1869 = vpow.pop %v1868
        %v1870 = vmul.f32 %v1858, 1.442695
        %v1871 = vpow.pop %v1870
        %v1872 = vmul.f32 %v1859, 1.442695
        %v1873 = vpow.pop %v1872
        %v1874 = vmul.f32 %v1860, 1.442695
        %v1875 = vpow.pop %v1874
        %v1876 = vmul.f32 %v1861, 1.442695
        %v1877 = vpow.pop %v1876
        %v1878 = vadd.f32 %v1863, 1.0
        %v1879 = vadd.f32 %v1865, 1.0
        %v1880 = vadd.f32 %v1867, 1.0
        %v1881 = vadd.f32 %v1869, 1.0
        %v1882 = vadd.f32 %v1871, 1.0
        %v1883 = vadd.f32 %v1873, 1.0
        %v1884 = vadd.f32 %v1875, 1.0
        %v1885 = vadd.f32 %v1877, 1.0
        %v1886 = vrcp.pop %v1878
        %v1887 = vrcp.pop %v1879
        %v1888 = vrcp.pop %v1880
        %v1889 = vrcp.pop %v1881
        %v1890 = vrcp.pop %v1882
        %v1891 = vrcp.pop %v1883
        %v1892 = vrcp.pop %v1884
        %v1893 = vrcp.pop %v1885
        %v1894 = vmul.f32 %v1824, %v1886
        %v1895 = vmul.f32 %v1827, %v1887
        %v1896 = vmul.f32 %v1832, %v1888
        %v1897 = vmul.f32 %v1835, %v1889
        %v1898 = vmul.f32 %v1840, %v1890
        %v1899 = vmul.f32 %v1843, %v1891
        %v1900 = vmul.f32 %v1848, %v1892
        %v1901 = vmul.f32 %v1851, %v1893
        %1910 = vrot.lane.b32.xlu0 %v1894, 16
        %v1911 = vpop.permute.xlu0 %1910
        %1912 = vrot.lane.b32.xlu0 %v1895, 16
        %v1913 = vpop.permute.xlu0 %1912
        %1914 = vrot.lane.b32.xlu0 %v1896, 16
        %v1915 = vpop.permute.xlu0 %1914
        %1916 = vrot.lane.b32.xlu0 %v1897, 16
        %v1917 = vpop.permute.xlu0 %1916
        %1918 = vrot.lane.b32.xlu0 %v1898, 16
        %v1919 = vpop.permute.xlu0 %1918
        %1920 = vrot.lane.b32.xlu0 %v1899, 16
        %v1921 = vpop.permute.xlu0 %1920
        %1922 = vrot.lane.b32.xlu0 %v1900, 16
        %v1923 = vpop.permute.xlu0 %1922
        %1924 = vrot.lane.b32.xlu0 %v1901, 16
        %v1925 = vpop.permute.xlu0 %1924
        %v1934 = vsel %vm1062, %v1692, %v1911
        %v1935 = vsel %vm1062, %v1693, %v1913
        %v1936 = vsel %vm1062, %v1694, %v1915
        %v1937 = vsel %vm1062, %v1695, %v1917
        %v1938 = vsel %vm1062, %v1696, %v1919
        %v1939 = vsel %vm1062, %v1697, %v1921
        %v1940 = vsel %vm1062, %v1698, %v1923
        %v1941 = vsel %vm1062, %v1699, %v1925
        %1942 = vst.msk [vmem:[%s188] sm:$0xff] %vm1102, %v1470
        %1943 = vst.msk [vmem:[%s188 + $0x8] sm:$0xff] %vm1102, %v1934
        %1944 = vst.msk [vmem:[%s188 + $0x10] sm:$0xff] %vm1102, %v1471
        %1945 = vst.msk [vmem:[%s188 + $0x18] sm:$0xff] %vm1102, %v1935
        %1946 = vst.msk [vmem:[%s188 + $0x20] sm:$0xff] %vm1102, %v1472
        %1947 = vst.msk [vmem:[%s188 + $0x28] sm:$0xff] %vm1102, %v1936
        %1948 = vst.msk [vmem:[%s188 + $0x30] sm:$0xff] %vm1102, %v1473
        %1949 = vst.msk [vmem:[%s188 + $0x38] sm:$0xff] %vm1102, %v1937
        %1950 = vst.msk [vmem:[%s188 + $0x40] sm:$0xff] %vm1102, %v1474
        %1951 = vst.msk [vmem:[%s188 + $0x48] sm:$0xff] %vm1102, %v1938
        %1952 = vst.msk [vmem:[%s188 + $0x50] sm:$0xff] %vm1102, %v1475
        %1953 = vst.msk [vmem:[%s188 + $0x58] sm:$0xff] %vm1102, %v1939
        %1954 = vst.msk [vmem:[%s188 + $0x60] sm:$0xff] %vm1102, %v1476
        %1955 = vst.msk [vmem:[%s188 + $0x68] sm:$0xff] %vm1102, %v1940
        %1956 = vst.msk [vmem:[%s188 + $0x70] sm:$0xff] %vm1102, %v1477
        %1957 = vst.msk [vmem:[%s188 + $0x78] sm:$0xff] %vm1102, %v1941
        %s1958 = sand.u32 %s96, 1
        %s1959 = scalar_lea.sflag [#allocation5], %s1958
        %s1960 = sand.u32 %s96, 1
        %s1961 = smul.addr %s1960, 128
        %s1962 = scalar_lea.vmem [#allocation6], %s1961
        // Predicated region
        $region37: #{tpu_custom_call.1} parent=31 // pred_check
          %p1963 = pneg %p106
        $region38: #{tpu_custom_call.1} parent=31 // pred_check_branch
          %1965 = sbr.rel (%p1963) target = $region40
        $region39: #{tpu_custom_call.1} parent=31 // pred_region
          %s1967 = ssub.s32 2048, 2048
          %1968 = vsyncadd %s1959, %s1967
          %s1969 = smul.addr %s20, 16
          %s1970 = smul.addr %s1969, 128
          %s1971 = scalar_lea.hbm %s3, %s1970
          %s1972 = sshll.u32 %s1962, 4
          %s1973 = int_to_ptr.vmem [resolvable:$true] %s1972
          %1978 = dma.vmem_to_hbm [thread:$0]  %s1973, 2048, %s1971, %s1959, 128, 128, 8
        $region40: #{tpu_custom_call.1} parent=31 // pred_fallthru
          _
      $region32: #{tpu_custom_call.1} parent=5 // pred_fallthru
        _
      %p1979 = scmp.le.s32.totalorder 2, %s15
      // Predicated region
      $region41: #{tpu_custom_call.1} parent=5 // pred_check
        %p1980 = pneg %p1979
      $region42: #{tpu_custom_call.1} parent=5 // pred_check_branch
        %1982 = sbr.rel (%p1980) target = $region44
      $region43: #{tpu_custom_call.1} parent=5 // pred_region
        %s1983 = ssub.s32 %s15, 2
        // Predicated region
        $region45: #{tpu_custom_call.1} parent=43 // pred_check
          %p1984 = pneg %p112
        $region46: #{tpu_custom_call.1} parent=43 // pred_check_branch
          %1986 = sbr.rel (%p1984) target = $region48
        $region47: #{tpu_custom_call.1} parent=43 // pred_region
          %s1987 = sand.u32 %s97, 1
          %s1988 = scalar_lea.sflag [#allocation5], %s1987
          %s1989 = sand.u32 %s97, 1
          %s1990 = smul.addr %s1989, 128
          %s1991 = scalar_lea.vmem [#allocation6], %s1990
          %1992 = dma.done %s1988, 2048
        $region48: #{tpu_custom_call.1} parent=43 // pred_fallthru
          _
      $region44: #{tpu_custom_call.1} parent=5 // pred_fallthru
        _
    $region6: #{tpu_custom_call.1} parent=1 // loop_footer
      %s19 = sadd.s32 1, %s15
    $region7: #{tpu_custom_call.1} parent=1 // loop_footer_branch
      %14 = sbr.rel target = $region3
    $region8: #{tpu_custom_call.1} parent=1 // loop_exit
      _
    %1993 = vsyncpa [#allocation4], 1
    %s1994 = scalar_lea.sflag [#allocation4], 1
    %1995 = vsyncpa %s1994, 1
    %1996 = vsyncpa [#allocation5], 1
    %s1997 = scalar_lea.sflag [#allocation5], 1
    %1998 = vsyncpa %s1997, 1

</llo_original>
